<compile_context>
chip_gen: v6e
topology: v6e:2x2x1
jax: 0.10.0
libtpu: 0.0.40
codegen_flags: <defaults>
</compile_context>

<pallas_src>
import jax
import jax.numpy as jnp
from jax.experimental import pallas as pl
from jax.experimental.pallas import tpu as pltpu

IN_FEATURES = 28 * 28   # 784
H1 = 512
H2 = 256
OUT_FEATURES = 10


def _mlp_kernel(x_ref, w1_ref, b1_ref, w2_ref, b2_ref, w3_ref, b3_ref, o_ref):
    # In-kernel f32->bf16 cast of the activations; f32 MXU accumulation; f32 VPU bias/ReLU.
    x = x_ref[...].astype(jnp.bfloat16)                                      # bf16 [TB, 784]
    h1 = jnp.dot(x, w1_ref[...], preferred_element_type=jnp.float32)         # f32  [TB, 512]
    h1 = jnp.maximum(h1 + b1_ref[...], 0.0)
    h2 = jnp.dot(h1.astype(jnp.bfloat16), w2_ref[...],
                 preferred_element_type=jnp.float32)                         # f32  [TB, 256]
    h2 = jnp.maximum(h2 + b2_ref[...], 0.0)
    out = jnp.dot(h2.astype(jnp.bfloat16), w3_ref[...],
                  preferred_element_type=jnp.float32)                        # f32  [TB, 10]
    o_ref[...] = (out + b3_ref[...]).astype(o_ref.dtype)


def _cost_estimate(batch):
    weight_elems = IN_FEATURES * H1 + H1 * H2 + H2 * OUT_FEATURES
    flops = 2 * batch * weight_elems
    bytes_accessed = (
        batch * IN_FEATURES * 4          # x (f32, cast to bf16 in-kernel)
        + weight_elems * 2               # weights (bf16)
        + (H1 + H2 + OUT_FEATURES) * 4   # biases (f32)
        + batch * OUT_FEATURES * 4       # output (f32, unpadded)
    )
    return pl.CostEstimate(flops=flops, transcendentals=0,
                           bytes_accessed=bytes_accessed)


def prepare_params(params):
    """One-time prep: bf16 weights, f32 row-vector biases. Call once, reuse across forwards."""
    w1, b1, w2, b2, w3, b3 = params
    return (
        w1.astype(jnp.bfloat16), b1.astype(jnp.float32).reshape(1, H1),
        w2.astype(jnp.bfloat16), b2.astype(jnp.float32).reshape(1, H2),
        w3.astype(jnp.bfloat16), b3.astype(jnp.float32).reshape(1, OUT_FEATURES),
    )


def mlp_forward(x, prepared_params, *, batch_tile=512, small_batch_threshold=256):
    """x: [B, 1, 28, 28] or [B, 784] float32. Returns [B, 10] float32."""
    w1b, b1f, w2b, b2f, w3b, b3f = prepared_params
    x2d = x.reshape(-1, IN_FEATURES).astype(jnp.float32)
    B = x2d.shape[0]

    if B <= small_batch_threshold:
        # Latency-bound small batch: single ungridded fused call, everything resident in VMEM.
        vmem = pl.BlockSpec(memory_space=pltpu.MemorySpace.VMEM)
        return pl.pallas_call(
            _mlp_kernel,
            out_shape=jax.ShapeDtypeStruct((B, OUT_FEATURES), jnp.float32),
            in_specs=[vmem] * 7,
            out_specs=vmem,
            compiler_params=pltpu.CompilerParams(
                vmem_limit_bytes=32 * 1024 * 1024,   # explicit budget; v5e default is only 16 MiB
            ),
            cost_estimate=_cost_estimate(B),
        )(x2d, w1b, b1f, w2b, b2f, w3b, b3f)

    # Throughput mode: 1-D batch grid; x is pipelined HBM->VMEM, weights stay resident
    # (constant index_maps). Ragged last tile is handled by Pallas (padded reads, masked writes),
    # so no explicit jnp.pad / slice round-trip through HBM.
    TB = batch_tile
    num_tiles = pl.cdiv(B, TB)
    const = lambda i: (0, 0)
    # NOTE: pl.Buffered(1) on the constant-index weight specs would halve their resident VMEM
    # (~1 MiB total here), but the weights are small enough that double-buffering is negligible.
    return pl.pallas_call(
        _mlp_kernel,
        out_shape=jax.ShapeDtypeStruct((B, OUT_FEATURES), jnp.float32),
        grid=(num_tiles,),
        in_specs=[
            pl.BlockSpec((TB, IN_FEATURES), lambda i: (i, 0)),
            pl.BlockSpec((IN_FEATURES, H1), const),
            pl.BlockSpec((1, H1), const),
            pl.BlockSpec((H1, H2), const),
            pl.BlockSpec((1, H2), const),
            pl.BlockSpec((H2, OUT_FEATURES), const),
            pl.BlockSpec((1, OUT_FEATURES), const),
        ],
        out_specs=pl.BlockSpec((TB, OUT_FEATURES), lambda i: (i, 0)),
        compiler_params=pltpu.CompilerParams(
            dimension_semantics=("parallel",),   # shard batch tiles across TCs on v7x
            vmem_limit_bytes=48 * 1024 * 1024,
        ),
        cost_estimate=_cost_estimate(B),
    )(x2d, w1b, b1f, w2b, b2f, w3b, b3f)


def init_params(key):
    """Deterministic init mirroring nn.Linear shapes (stored as [in, out])."""
    k1, k2, k3, k4, k5, k6 = jax.random.split(key, 6)

    def linear_init(kw, kb, fan_in, fan_out):
        bound = 1.0 / jnp.sqrt(fan_in)
        w = jax.random.uniform(kw, (fan_in, fan_out), jnp.float32, -bound, bound)
        b = jax.random.uniform(kb, (1, fan_out), jnp.float32, -bound, bound)
        return w, b

    w1, b1 = linear_init(k1, k2, IN_FEATURES, H1)
    w2, b2 = linear_init(k3, k4, H1, H2)
    w3, b3 = linear_init(k5, k6, H2, OUT_FEATURES)
    return (w1, b1, w2, b2, w3, b3)


def mlp_reference(x, params):
    """Pure-JAX reference with the same bf16-input / f32-accumulate numerics."""
    w1, b1, w2, b2, w3, b3 = params
    hp = jax.lax.Precision.HIGHEST

    def bf16(a):
        return a.astype(jnp.bfloat16).astype(jnp.float32)

    x2d = x.reshape(-1, IN_FEATURES).astype(jnp.float32)
    h1 = jax.nn.relu(jnp.dot(bf16(x2d), bf16(w1), precision=hp) + b1)
    h2 = jax.nn.relu(jnp.dot(bf16(h1), bf16(w2), precision=hp) + b2)
    return jnp.dot(bf16(h2), bf16(w3), precision=hp) + b3


if __name__ == "__main__":
    key = jax.random.PRNGKey(0)
    kx, kp, kx2 = jax.random.split(key, 3)
    params = init_params(kp)
    prepared = prepare_params(params)   # one-time weight prep, outside the forward path

    # Small batch (latency path), MNIST-like NCHW input.
    x_small = jax.random.normal(kx, (8, 1, 28, 28), jnp.float32)
    out_small = jax.block_until_ready(mlp_forward(x_small, prepared))
    ref_small = mlp_reference(x_small, params)
    assert out_small.shape == (8, 10), out_small.shape
    assert jnp.allclose(out_small, ref_small, atol=5e-2, rtol=5e-2), \
        "small-batch mismatch vs JAX reference"

    # Modest batch (tiled/throughput path); 640 rows with TB=256 -> 3 tiles, ragged last tile.
    x_big = jax.random.normal(kx2, (640, 1, 28, 28), jnp.float32)
    out_big = jax.block_until_ready(mlp_forward(x_big, prepared, batch_tile=256))
    ref_big = mlp_reference(x_big, params)
    assert out_big.shape == (640, 10), out_big.shape
    assert jnp.allclose(out_big, ref_big, atol=5e-2, rtol=5e-2), \
        "tiled-batch mismatch vs JAX reference"

    print("KERNEL_OK")
</pallas_src>

<mosaic_0001>
module attributes {stable_mosaic.version = 11 : i64} {
  func.func @_mlp_kernel(%arg0: memref<8x784xf32, #tpu.memory_space<vmem>>, %arg1: memref<784x512xbf16, #tpu.memory_space<vmem>>, %arg2: memref<1x512xf32, #tpu.memory_space<vmem>>, %arg3: memref<512x256xbf16, #tpu.memory_space<vmem>>, %arg4: memref<1x256xf32, #tpu.memory_space<vmem>>, %arg5: memref<256x10xbf16, #tpu.memory_space<vmem>>, %arg6: memref<1x10xf32, #tpu.memory_space<vmem>>, %arg7: memref<8x10xf32, #tpu.memory_space<vmem>>) attributes {dimension_semantics = [], scalar_prefetch = 0 : i64, scratch_operands = 0 : i64, tpu.core_type = #tpu.core_type<tc>} {
    %c0 = arith.constant 0 : index
    %c0_0 = arith.constant 0 : index
    %0 = vector.load %arg0[%c0, %c0_0] : memref<8x784xf32, #tpu.memory_space<vmem>>, vector<8x784xf32>
    %1 = arith.truncf %0 : vector<8x784xf32> to vector<8x784xbf16>
    %c0_1 = arith.constant 0 : index
    %c0_2 = arith.constant 0 : index
    %2 = vector.load %arg1[%c0_1, %c0_2] : memref<784x512xbf16, #tpu.memory_space<vmem>>, vector<784x512xbf16>
    %cst = arith.constant dense<0.000000e+00> : vector<8x512xf32>
    %3 = tpu.matmul %1, %2, %cst {dimension_numbers = #tpu.dot_dimension_numbers<[1], [0], [0], [1], [0, 0, 1, 1], [], []>} : vector<8x784xbf16>, vector<784x512xbf16>, vector<8x512xf32> -> vector<8x512xf32>
    %c0_3 = arith.constant 0 : index
    %c0_4 = arith.constant 0 : index
    %4 = vector.load %arg2[%c0_3, %c0_4] : memref<1x512xf32, #tpu.memory_space<vmem>>, vector<1x512xf32>
    %5 = vector.broadcast %4 : vector<1x512xf32> to vector<8x512xf32>
    %6 = arith.addf %3, %5 : vector<8x512xf32>
    %cst_5 = arith.constant 0.000000e+00 : f32
    %7 = vector.broadcast %cst_5 : f32 to vector<8x512xf32>
    %8 = arith.maximumf %6, %7 : vector<8x512xf32>
    %9 = arith.truncf %8 : vector<8x512xf32> to vector<8x512xbf16>
    %c0_6 = arith.constant 0 : index
    %c0_7 = arith.constant 0 : index
    %10 = vector.load %arg3[%c0_6, %c0_7] : memref<512x256xbf16, #tpu.memory_space<vmem>>, vector<512x256xbf16>
    %cst_8 = arith.constant dense<0.000000e+00> : vector<8x256xf32>
    %11 = tpu.matmul %9, %10, %cst_8 {dimension_numbers = #tpu.dot_dimension_numbers<[1], [0], [0], [1], [0, 0, 1, 1], [], []>} : vector<8x512xbf16>, vector<512x256xbf16>, vector<8x256xf32> -> vector<8x256xf32>
    %c0_9 = arith.constant 0 : index
    %c0_10 = arith.constant 0 : index
    %12 = vector.load %arg4[%c0_9, %c0_10] : memref<1x256xf32, #tpu.memory_space<vmem>>, vector<1x256xf32>
    %13 = vector.broadcast %12 : vector<1x256xf32> to vector<8x256xf32>
    %14 = arith.addf %11, %13 : vector<8x256xf32>
    %cst_11 = arith.constant 0.000000e+00 : f32
    %15 = vector.broadcast %cst_11 : f32 to vector<8x256xf32>
    %16 = arith.maximumf %14, %15 : vector<8x256xf32>
    %17 = arith.truncf %16 : vector<8x256xf32> to vector<8x256xbf16>
    %c0_12 = arith.constant 0 : index
    %c0_13 = arith.constant 0 : index
    %18 = vector.load %arg5[%c0_12, %c0_13] : memref<256x10xbf16, #tpu.memory_space<vmem>>, vector<256x10xbf16>
    %cst_14 = arith.constant dense<0.000000e+00> : vector<8x10xf32>
    %19 = tpu.matmul %17, %18, %cst_14 {dimension_numbers = #tpu.dot_dimension_numbers<[1], [0], [0], [1], [0, 0, 1, 1], [], []>} : vector<8x256xbf16>, vector<256x10xbf16>, vector<8x10xf32> -> vector<8x10xf32>
    %c0_15 = arith.constant 0 : index
    %c0_16 = arith.constant 0 : index
    %20 = vector.load %arg6[%c0_15, %c0_16] : memref<1x10xf32, #tpu.memory_space<vmem>>, vector<1x10xf32>
    %21 = vector.broadcast %20 : vector<1x10xf32> to vector<8x10xf32>
    %22 = arith.addf %19, %21 : vector<8x10xf32>
    %c0_17 = arith.constant 0 : index
    %c0_18 = arith.constant 0 : index
    %23 = vector.load %arg7[%c0_17, %c0_18] : memref<8x10xf32, #tpu.memory_space<vmem>>, vector<8x10xf32>
    tpu.vector_store %arg7[%c0_17, %c0_18], %22 {strides = array<i32>} : memref<8x10xf32, #tpu.memory_space<vmem>>, vector<8x10xf32>,
    return
  }
}

</mosaic_0001>

<llo_original>
// kernel: tpu_custom_call.1
$region0: #{tpu_custom_call.1}
  #allocation0 [shape = 'u32[]', space=smem, size = 0x4, offset = 0x4, fixed_abs, tag = 'smem constant byte address 0x4 - core index']
  #allocation1 [shape = 'u32[144,128]{1,0:T(1,128)}', space=vmem, size = 0x12000, scoped, tag = 'internal scratch']
  %s0 = inlined_call_operand.vmem [shape: f32[8,784], index: 0, kind: input, shape index: {}]
  %s1 = inlined_call_operand.hbm [shape: bf16[784,512], index: 1, kind: input, shape index: {}]
  %s2 = inlined_call_operand.vmem [shape: f32[1,512], index: 2, kind: input, shape index: {}]
  %s3 = inlined_call_operand.hbm [shape: bf16[512,256], index: 3, kind: input, shape index: {}]
  %s4 = inlined_call_operand.vmem [shape: f32[1,256], index: 4, kind: input, shape index: {}]
  %s5 = inlined_call_operand.vmem [shape: bf16[256,10], index: 5, kind: input, shape index: {}]
  %s6 = inlined_call_operand.vmem [shape: f32[1,10], index: 6, kind: input, shape index: {}]
  %s7 = inlined_call_operand.hbm [shape: f32[8,10], index: 7, kind: output, shape index: {}]
  %s8 = sld [smem:[#allocation0]]
  $region46: #{tpu_custom_call.1} parent=0
    _
  %s10 = ssub.s32 1, %s8
  %s11 = scalar_select 0, %s10, %s8
  $region1: #{tpu_custom_call.1} parent=0
    #allocation2 [shape = 'u8[802816]{0}', space=vmem, size = 0xc4000, scoped, tag = 'input window, operand 1, single buffered']
    #allocation3 [shape = 's32[1]{0}', space=sflag, size = 0x4, scoped, tag = 'scoped memory for tpu_custom_call.1']
    #allocation4 [shape = 's32[1]{0}', space=sflag, size = 0x4, scoped, tag = 'scoped memory for tpu_custom_call.1']
    #allocation5 [shape = 'u8[262144]{0}', space=vmem, size = 0x40000, scoped, tag = 'input window, operand 3, single buffered']
    #allocation6 [shape = 's32[1]{0}', space=sflag, size = 0x4, scoped, tag = 'scoped memory for tpu_custom_call.1']
    #allocation7 [shape = 'u8[4096]{0}', space=vmem, size = 0x1000, scoped, tag = 'output window, operand 0, single buffered']
    %12 = vsyncpa [#allocation3], 0
    %13 = vsyncpa [#allocation6], 0
    %14 = vsyncpa [#allocation4], 0
    // Predicated region
    $region2: #{tpu_custom_call.1} parent=1 // pred_check
      _
    $region3: #{tpu_custom_call.1} parent=1 // pred_check_branch
      %16 = sbr.rel (0) target = $region5
    $region4: #{tpu_custom_call.1} parent=1 // pred_region
      _
    $region5: #{tpu_custom_call.1} parent=1 // pred_fallthru
      _
    // Predicated region
    $region6: #{tpu_custom_call.1} parent=1 // pred_check
      _
    $region7: #{tpu_custom_call.1} parent=1 // pred_check_branch
      %18 = sbr.rel (0) target = $region9
    $region8: #{tpu_custom_call.1} parent=1 // pred_region
      %s20 = ssub.s32 25088, 25088
      %21 = vsyncadd [#allocation3], %s20
      %s22 = sshll.u32 [#allocation2], 4
      %s23 = int_to_ptr.vmem [resolvable:$true] %s22
      %28 = dma.hbm_to_vmem [thread:$0]  %s1, 25088, %s23, [#allocation3], 256, 256, 16
    $region9: #{tpu_custom_call.1} parent=1 // pred_fallthru
      _
    // Predicated region
    $region10: #{tpu_custom_call.1} parent=1 // pred_check
      _
    $region11: #{tpu_custom_call.1} parent=1 // pred_check_branch
      %30 = sbr.rel (0) target = $region13
    $region12: #{tpu_custom_call.1} parent=1 // pred_region
      _
    $region13: #{tpu_custom_call.1} parent=1 // pred_fallthru
      _
    // Predicated region
    $region14: #{tpu_custom_call.1} parent=1 // pred_check
      _
    $region15: #{tpu_custom_call.1} parent=1 // pred_check_branch
      %32 = sbr.rel (0) target = $region17
    $region16: #{tpu_custom_call.1} parent=1 // pred_region
      %s34 = ssub.s32 8192, 8192
      %35 = vsyncadd [#allocation6], %s34
      %s36 = sshll.u32 [#allocation5], 4
      %s37 = int_to_ptr.vmem [resolvable:$true] %s36
      %42 = dma.hbm_to_vmem [thread:$0]  %s3, 8192, %s37, [#allocation6], 128, 128, 8
    $region17: #{tpu_custom_call.1} parent=1 // pred_fallthru
      _
    // Predicated region
    $region18: #{tpu_custom_call.1} parent=1 // pred_check
      _
    $region19: #{tpu_custom_call.1} parent=1 // pred_check_branch
      %44 = sbr.rel (0) target = $region21
    $region20: #{tpu_custom_call.1} parent=1 // pred_region
      _
    $region21: #{tpu_custom_call.1} parent=1 // pred_fallthru
      _
    // Predicated region
    $region22: #{tpu_custom_call.1} parent=1 // pred_check
      _
    $region23: #{tpu_custom_call.1} parent=1 // pred_check_branch
      %46 = sbr.rel (0) target = $region25
    $region24: #{tpu_custom_call.1} parent=1 // pred_region
      _
    $region25: #{tpu_custom_call.1} parent=1 // pred_fallthru
      _
    // Predicated region
    $region26: #{tpu_custom_call.1} parent=1 // pred_check
      _
    $region27: #{tpu_custom_call.1} parent=1 // pred_check_branch
      %48 = sbr.rel (0) target = $region29
    $region28: #{tpu_custom_call.1} parent=1 // pred_region
      _
    $region29: #{tpu_custom_call.1} parent=1 // pred_fallthru
      _
    // Predicated region
    $region30: #{tpu_custom_call.1} parent=1 // pred_check
      _
    $region31: #{tpu_custom_call.1} parent=1 // pred_check_branch
      %50 = sbr.rel (0) target = $region33
    $region32: #{tpu_custom_call.1} parent=1 // pred_region
      %51 = dma.done [#allocation3], 25088
    $region33: #{tpu_custom_call.1} parent=1 // pred_fallthru
      _
    // Predicated region
    $region34: #{tpu_custom_call.1} parent=1 // pred_check
      _
    $region35: #{tpu_custom_call.1} parent=1 // pred_check_branch
      %53 = sbr.rel (0) target = $region37
    $region36: #{tpu_custom_call.1} parent=1 // pred_region
      %54 = dma.done [#allocation6], 8192
    $region37: #{tpu_custom_call.1} parent=1 // pred_fallthru
      _
    %v56 = vld [vmem:[%s0] sm:$0xff]
    %v57 = vld [vmem:[%s0 + $0x8] sm:$0xff]
    %v58 = vld [vmem:[%s0 + $0x10] sm:$0xff]
    %v59 = vld [vmem:[%s0 + $0x18] sm:$0xff]
    %v60 = vld [vmem:[%s0 + $0x20] sm:$0xff]
    %v61 = vld [vmem:[%s0 + $0x28] sm:$0xff]
    %v62 = vld [vmem:[%s0 + $0x30] sm:$0xff]
    %v63 = vpack.c.bf16 %v56, %v56
    %v64 = vpack.c.bf16 %v57, %v57
    %v65 = vpack.c.bf16 %v58, %v58
    %v66 = vpack.c.bf16 %v59, %v59
    %v67 = vpack.c.bf16 %v60, %v60
    %v68 = vpack.c.bf16 %v61, %v61
    %v69 = vpack.c.bf16 %v62, %v62
    %v70 = vld [vmem:[#allocation2] sm:$0xff]
    %v71 = vld [vmem:[#allocation2 + $0x8] sm:$0xff]
    %v72 = vld [vmem:[#allocation2 + $0x10] sm:$0xff]
    %v73 = vld [vmem:[#allocation2 + $0x18] sm:$0xff]
    %v74 = vld [vmem:[#allocation2 + $0x20] sm:$0xff]
    %v75 = vld [vmem:[#allocation2 + $0x28] sm:$0xff]
    %v76 = vld [vmem:[#allocation2 + $0x30] sm:$0xff]
    %v77 = vld [vmem:[#allocation2 + $0x38] sm:$0xff]
    %v78 = vld [vmem:[#allocation2 + $0x40] sm:$0xff]
    %v79 = vld [vmem:[#allocation2 + $0x48] sm:$0xff]
    %v80 = vld [vmem:[#allocation2 + $0x50] sm:$0xff]
    %v81 = vld [vmem:[#allocation2 + $0x58] sm:$0xff]
    %v82 = vld [vmem:[#allocation2 + $0x60] sm:$0xff]
    %v83 = vld [vmem:[#allocation2 + $0x68] sm:$0xff]
    %v84 = vld [vmem:[#allocation2 + $0x70] sm:$0xff]
    %v85 = vld [vmem:[#allocation2 + $0x78] sm:$0xff]
    %v86 = vld [vmem:[#allocation2 + $0x80] sm:$0xff]
    %v87 = vld [vmem:[#allocation2 + $0x88] sm:$0xff]
    %v88 = vld [vmem:[#allocation2 + $0x90] sm:$0xff]
    %v89 = vld [vmem:[#allocation2 + $0x98] sm:$0xff]
    %v90 = vld [vmem:[#allocation2 + $0xa0] sm:$0xff]
    %v91 = vld [vmem:[#allocation2 + $0xa8] sm:$0xff]
    %v92 = vld [vmem:[#allocation2 + $0xb0] sm:$0xff]
    %v93 = vld [vmem:[#allocation2 + $0xb8] sm:$0xff]
    %v94 = vld [vmem:[#allocation2 + $0xc0] sm:$0xff]
    %v95 = vld [vmem:[#allocation2 + $0xc8] sm:$0xff]
    %v96 = vld [vmem:[#allocation2 + $0xd0] sm:$0xff]
    %v97 = vld [vmem:[#allocation2 + $0xd8] sm:$0xff]
    %v98 = vld [vmem:[#allocation2 + $0xe0] sm:$0xff]
    %v99 = vld [vmem:[#allocation2 + $0xe8] sm:$0xff]
    %v100 = vld [vmem:[#allocation2 + $0xf0] sm:$0xff]
    %v101 = vld [vmem:[#allocation2 + $0xf8] sm:$0xff]
    %v102 = vld [vmem:[#allocation2 + $0x100] sm:$0xff]
    %v103 = vld [vmem:[#allocation2 + $0x108] sm:$0xff]
    %v104 = vld [vmem:[#allocation2 + $0x110] sm:$0xff]
    %v105 = vld [vmem:[#allocation2 + $0x118] sm:$0xff]
    %v106 = vld [vmem:[#allocation2 + $0x120] sm:$0xff]
    %v107 = vld [vmem:[#allocation2 + $0x128] sm:$0xff]
    %v108 = vld [vmem:[#allocation2 + $0x130] sm:$0xff]
    %v109 = vld [vmem:[#allocation2 + $0x138] sm:$0xff]
    %v110 = vld [vmem:[#allocation2 + $0x140] sm:$0xff]
    %v111 = vld [vmem:[#allocation2 + $0x148] sm:$0xff]
    %v112 = vld [vmem:[#allocation2 + $0x150] sm:$0xff]
    %v113 = vld [vmem:[#allocation2 + $0x158] sm:$0xff]
    %v114 = vld [vmem:[#allocation2 + $0x160] sm:$0xff]
    %v115 = vld [vmem:[#allocation2 + $0x168] sm:$0xff]
    %v116 = vld [vmem:[#allocation2 + $0x170] sm:$0xff]
    %v117 = vld [vmem:[#allocation2 + $0x178] sm:$0xff]
    %v118 = vld [vmem:[#allocation2 + $0x180] sm:$0xff]
    %v119 = vld [vmem:[#allocation2 + $0x188] sm:$0xff]
    %v120 = vld [vmem:[#allocation2 + $0x190] sm:$0xff]
    %v121 = vld [vmem:[#allocation2 + $0x198] sm:$0xff]
    %v122 = vld [vmem:[#allocation2 + $0x1a0] sm:$0xff]
    %v123 = vld [vmem:[#allocation2 + $0x1a8] sm:$0xff]
    %v124 = vld [vmem:[#allocation2 + $0x1b0] sm:$0xff]
    %v125 = vld [vmem:[#allocation2 + $0x1b8] sm:$0xff]
    %v126 = vld [vmem:[#allocation2 + $0x1c0] sm:$0xff]
    %v127 = vld [vmem:[#allocation2 + $0x1c8] sm:$0xff]
    %v128 = vld [vmem:[#allocation2 + $0x1d0] sm:$0xff]
    %v129 = vld [vmem:[#allocation2 + $0x1d8] sm:$0xff]
    %v130 = vld [vmem:[#allocation2 + $0x1e0] sm:$0xff]
    %v131 = vld [vmem:[#allocation2 + $0x1e8] sm:$0xff]
    %v132 = vld [vmem:[#allocation2 + $0x1f0] sm:$0xff]
    %v133 = vld [vmem:[#allocation2 + $0x1f8] sm:$0xff]
    %v134 = vld [vmem:[#allocation2 + $0x200] sm:$0xff]
    %v135 = vld [vmem:[#allocation2 + $0x208] sm:$0xff]
    %v136 = vld [vmem:[#allocation2 + $0x210] sm:$0xff]
    %v137 = vld [vmem:[#allocation2 + $0x218] sm:$0xff]
    %v138 = vld [vmem:[#allocation2 + $0x220] sm:$0xff]
    %v139 = vld [vmem:[#allocation2 + $0x228] sm:$0xff]
    %v140 = vld [vmem:[#allocation2 + $0x230] sm:$0xff]
    %v141 = vld [vmem:[#allocation2 + $0x238] sm:$0xff]
    %v142 = vld [vmem:[#allocation2 + $0x240] sm:$0xff]
    %v143 = vld [vmem:[#allocation2 + $0x248] sm:$0xff]
    %v144 = vld [vmem:[#allocation2 + $0x250] sm:$0xff]
    %v145 = vld [vmem:[#allocation2 + $0x258] sm:$0xff]
    %v146 = vld [vmem:[#allocation2 + $0x260] sm:$0xff]
    %v147 = vld [vmem:[#allocation2 + $0x268] sm:$0xff]
    %v148 = vld [vmem:[#allocation2 + $0x270] sm:$0xff]
    %v149 = vld [vmem:[#allocation2 + $0x278] sm:$0xff]
    %v150 = vld [vmem:[#allocation2 + $0x280] sm:$0xff]
    %v151 = vld [vmem:[#allocation2 + $0x288] sm:$0xff]
    %v152 = vld [vmem:[#allocation2 + $0x290] sm:$0xff]
    %v153 = vld [vmem:[#allocation2 + $0x298] sm:$0xff]
    %v154 = vld [vmem:[#allocation2 + $0x2a0] sm:$0xff]
    %v155 = vld [vmem:[#allocation2 + $0x2a8] sm:$0xff]
    %v156 = vld [vmem:[#allocation2 + $0x2b0] sm:$0xff]
    %v157 = vld [vmem:[#allocation2 + $0x2b8] sm:$0xff]
    %v158 = vld [vmem:[#allocation2 + $0x2c0] sm:$0xff]
    %v159 = vld [vmem:[#allocation2 + $0x2c8] sm:$0xff]
    %v160 = vld [vmem:[#allocation2 + $0x2d0] sm:$0xff]
    %v161 = vld [vmem:[#allocation2 + $0x2d8] sm:$0xff]
    %v162 = vld [vmem:[#allocation2 + $0x2e0] sm:$0xff]
    %v163 = vld [vmem:[#allocation2 + $0x2e8] sm:$0xff]
    %v164 = vld [vmem:[#allocation2 + $0x2f0] sm:$0xff]
    %v165 = vld [vmem:[#allocation2 + $0x2f8] sm:$0xff]
    %v166 = vld [vmem:[#allocation2 + $0x300] sm:$0xff]
    %v167 = vld [vmem:[#allocation2 + $0x308] sm:$0xff]
    %v168 = vld [vmem:[#allocation2 + $0x310] sm:$0xff]
    %v169 = vld [vmem:[#allocation2 + $0x318] sm:$0xff]
    %v170 = vld [vmem:[#allocation2 + $0x320] sm:$0xff]
    %v171 = vld [vmem:[#allocation2 + $0x328] sm:$0xff]
    %v172 = vld [vmem:[#allocation2 + $0x330] sm:$0xff]
    %v173 = vld [vmem:[#allocation2 + $0x338] sm:$0xff]
    %v174 = vld [vmem:[#allocation2 + $0x340] sm:$0xff]
    %v175 = vld [vmem:[#allocation2 + $0x348] sm:$0xff]
    %v176 = vld [vmem:[#allocation2 + $0x350] sm:$0xff]
    %v177 = vld [vmem:[#allocation2 + $0x358] sm:$0xff]
    %v178 = vld [vmem:[#allocation2 + $0x360] sm:$0xff]
    %v179 = vld [vmem:[#allocation2 + $0x368] sm:$0xff]
    %v180 = vld [vmem:[#allocation2 + $0x370] sm:$0xff]
    %v181 = vld [vmem:[#allocation2 + $0x378] sm:$0xff]
    %v182 = vld [vmem:[#allocation2 + $0x380] sm:$0xff]
    %v183 = vld [vmem:[#allocation2 + $0x388] sm:$0xff]
    %v184 = vld [vmem:[#allocation2 + $0x390] sm:$0xff]
    %v185 = vld [vmem:[#allocation2 + $0x398] sm:$0xff]
    %v186 = vld [vmem:[#allocation2 + $0x3a0] sm:$0xff]
    %v187 = vld [vmem:[#allocation2 + $0x3a8] sm:$0xff]
    %v188 = vld [vmem:[#allocation2 + $0x3b0] sm:$0xff]
    %v189 = vld [vmem:[#allocation2 + $0x3b8] sm:$0xff]
    %v190 = vld [vmem:[#allocation2 + $0x3c0] sm:$0xff]
    %v191 = vld [vmem:[#allocation2 + $0x3c8] sm:$0xff]
    %v192 = vld [vmem:[#allocation2 + $0x3d0] sm:$0xff]
    %v193 = vld [vmem:[#allocation2 + $0x3d8] sm:$0xff]
    %v194 = vld [vmem:[#allocation2 + $0x3e0] sm:$0xff]
    %v195 = vld [vmem:[#allocation2 + $0x3e8] sm:$0xff]
    %v196 = vld [vmem:[#allocation2 + $0x3f0] sm:$0xff]
    %v197 = vld [vmem:[#allocation2 + $0x3f8] sm:$0xff]
    %v198 = vld [vmem:[#allocation2 + $0x400] sm:$0xff]
    %v199 = vld [vmem:[#allocation2 + $0x408] sm:$0xff]
    %v200 = vld [vmem:[#allocation2 + $0x410] sm:$0xff]
    %v201 = vld [vmem:[#allocation2 + $0x418] sm:$0xff]
    %v202 = vld [vmem:[#allocation2 + $0x420] sm:$0xff]
    %v203 = vld [vmem:[#allocation2 + $0x428] sm:$0xff]
    %v204 = vld [vmem:[#allocation2 + $0x430] sm:$0xff]
    %v205 = vld [vmem:[#allocation2 + $0x438] sm:$0xff]
    %v206 = vld [vmem:[#allocation2 + $0x440] sm:$0xff]
    %v207 = vld [vmem:[#allocation2 + $0x448] sm:$0xff]
    %v208 = vld [vmem:[#allocation2 + $0x450] sm:$0xff]
    %v209 = vld [vmem:[#allocation2 + $0x458] sm:$0xff]
    %v210 = vld [vmem:[#allocation2 + $0x460] sm:$0xff]
    %v211 = vld [vmem:[#allocation2 + $0x468] sm:$0xff]
    %v212 = vld [vmem:[#allocation2 + $0x470] sm:$0xff]
    %v213 = vld [vmem:[#allocation2 + $0x478] sm:$0xff]
    %v214 = vld [vmem:[#allocation2 + $0x480] sm:$0xff]
    %v215 = vld [vmem:[#allocation2 + $0x488] sm:$0xff]
    %v216 = vld [vmem:[#allocation2 + $0x490] sm:$0xff]
    %v217 = vld [vmem:[#allocation2 + $0x498] sm:$0xff]
    %v218 = vld [vmem:[#allocation2 + $0x4a0] sm:$0xff]
    %v219 = vld [vmem:[#allocation2 + $0x4a8] sm:$0xff]
    %v220 = vld [vmem:[#allocation2 + $0x4b0] sm:$0xff]
    %v221 = vld [vmem:[#allocation2 + $0x4b8] sm:$0xff]
    %v222 = vld [vmem:[#allocation2 + $0x4c0] sm:$0xff]
    %v223 = vld [vmem:[#allocation2 + $0x4c8] sm:$0xff]
    %v224 = vld [vmem:[#allocation2 + $0x4d0] sm:$0xff]
    %v225 = vld [vmem:[#allocation2 + $0x4d8] sm:$0xff]
    %v226 = vld [vmem:[#allocation2 + $0x4e0] sm:$0xff]
    %v227 = vld [vmem:[#allocation2 + $0x4e8] sm:$0xff]
    %v228 = vld [vmem:[#allocation2 + $0x4f0] sm:$0xff]
    %v229 = vld [vmem:[#allocation2 + $0x4f8] sm:$0xff]
    %v230 = vld [vmem:[#allocation2 + $0x500] sm:$0xff]
    %v231 = vld [vmem:[#allocation2 + $0x508] sm:$0xff]
    %v232 = vld [vmem:[#allocation2 + $0x510] sm:$0xff]
    %v233 = vld [vmem:[#allocation2 + $0x518] sm:$0xff]
    %v234 = vld [vmem:[#allocation2 + $0x520] sm:$0xff]
    %v235 = vld [vmem:[#allocation2 + $0x528] sm:$0xff]
    %v236 = vld [vmem:[#allocation2 + $0x530] sm:$0xff]
    %v237 = vld [vmem:[#allocation2 + $0x538] sm:$0xff]
    %v238 = vld [vmem:[#allocation2 + $0x540] sm:$0xff]
    %v239 = vld [vmem:[#allocation2 + $0x548] sm:$0xff]
    %v240 = vld [vmem:[#allocation2 + $0x550] sm:$0xff]
    %v241 = vld [vmem:[#allocation2 + $0x558] sm:$0xff]
    %v242 = vld [vmem:[#allocation2 + $0x560] sm:$0xff]
    %v243 = vld [vmem:[#allocation2 + $0x568] sm:$0xff]
    %v244 = vld [vmem:[#allocation2 + $0x570] sm:$0xff]
    %v245 = vld [vmem:[#allocation2 + $0x578] sm:$0xff]
    %v246 = vld [vmem:[#allocation2 + $0x580] sm:$0xff]
    %v247 = vld [vmem:[#allocation2 + $0x588] sm:$0xff]
    %v248 = vld [vmem:[#allocation2 + $0x590] sm:$0xff]
    %v249 = vld [vmem:[#allocation2 + $0x598] sm:$0xff]
    %v250 = vld [vmem:[#allocation2 + $0x5a0] sm:$0xff]
    %v251 = vld [vmem:[#allocation2 + $0x5a8] sm:$0xff]
    %v252 = vld [vmem:[#allocation2 + $0x5b0] sm:$0xff]
    %v253 = vld [vmem:[#allocation2 + $0x5b8] sm:$0xff]
    %v254 = vld [vmem:[#allocation2 + $0x5c0] sm:$0xff]
    %v255 = vld [vmem:[#allocation2 + $0x5c8] sm:$0xff]
    %v256 = vld [vmem:[#allocation2 + $0x5d0] sm:$0xff]
    %v257 = vld [vmem:[#allocation2 + $0x5d8] sm:$0xff]
    %v258 = vld [vmem:[#allocation2 + $0x5e0] sm:$0xff]
    %v259 = vld [vmem:[#allocation2 + $0x5e8] sm:$0xff]
    %v260 = vld [vmem:[#allocation2 + $0x5f0] sm:$0xff]
    %v261 = vld [vmem:[#allocation2 + $0x5f8] sm:$0xff]
    %v262 = vld [vmem:[#allocation2 + $0x600] sm:$0xff]
    %v263 = vld [vmem:[#allocation2 + $0x608] sm:$0xff]
    %v264 = vld [vmem:[#allocation2 + $0x610] sm:$0xff]
    %v265 = vld [vmem:[#allocation2 + $0x618] sm:$0xff]
    %v266 = vld [vmem:[%s2] sm:$0xf]
    %v268 = vlaneseq
    %v269 = vshrl.u32 %v268, 7
    %v270 = vsub.s32 0, %v269
    %v271 = vrot.slane %v266, %v270
    %v272 = vlaneseq
    %v273 = vshrl.u32 %v272, 7
    %v274 = vsub.s32 1, %v273
    %v275 = vrot.slane %v266, %v274
    %v276 = vlaneseq
    %v277 = vshrl.u32 %v276, 7
    %v278 = vsub.s32 2, %v277
    %v279 = vrot.slane %v266, %v278
    %v280 = vlaneseq
    %v281 = vshrl.u32 %v280, 7
    %v282 = vsub.s32 3, %v281
    %v283 = vrot.slane %v266, %v282
    %v484 = vunpack.c.l.b16 %v70
    %v485 = vunpack.c.h.b16 %v70
    %v486 = vunpack.c.l.b16 %v71
    %v487 = vunpack.c.h.b16 %v71
    %v488 = vunpack.c.l.b16 %v72
    %v489 = vunpack.c.h.b16 %v72
    %v490 = vunpack.c.l.b16 %v73
    %v491 = vunpack.c.h.b16 %v73
    %v492 = vunpack.c.l.b16 %v74
    %v493 = vunpack.c.h.b16 %v74
    %v494 = vunpack.c.l.b16 %v75
    %v495 = vunpack.c.h.b16 %v75
    %v496 = vunpack.c.l.b16 %v76
    %v497 = vunpack.c.h.b16 %v76
    %v498 = vunpack.c.l.b16 %v77
    %v499 = vunpack.c.h.b16 %v77
    %v500 = vunpack.c.l.b16 %v78
    %v501 = vunpack.c.h.b16 %v78
    %v502 = vunpack.c.l.b16 %v79
    %v503 = vunpack.c.h.b16 %v79
    %v504 = vunpack.c.l.b16 %v80
    %v505 = vunpack.c.h.b16 %v80
    %v506 = vunpack.c.l.b16 %v81
    %v507 = vunpack.c.h.b16 %v81
    %v508 = vunpack.c.l.b16 %v82
    %v509 = vunpack.c.h.b16 %v82
    %v510 = vunpack.c.l.b16 %v83
    %v511 = vunpack.c.h.b16 %v83
    %v512 = vunpack.c.l.b16 %v84
    %v513 = vunpack.c.h.b16 %v84
    %v514 = vunpack.c.l.b16 %v85
    %v515 = vunpack.c.h.b16 %v85
    %v516 = vunpack.c.l.b16 %v86
    %v517 = vunpack.c.h.b16 %v86
    %v518 = vunpack.c.l.b16 %v87
    %v519 = vunpack.c.h.b16 %v87
    %v520 = vunpack.c.l.b16 %v88
    %v521 = vunpack.c.h.b16 %v88
    %v522 = vunpack.c.l.b16 %v89
    %v523 = vunpack.c.h.b16 %v89
    %v524 = vunpack.c.l.b16 %v90
    %v525 = vunpack.c.h.b16 %v90
    %v526 = vunpack.c.l.b16 %v91
    %v527 = vunpack.c.h.b16 %v91
    %v528 = vunpack.c.l.b16 %v92
    %v529 = vunpack.c.h.b16 %v92
    %v530 = vunpack.c.l.b16 %v93
    %v531 = vunpack.c.h.b16 %v93
    %v532 = vunpack.c.l.b16 %v94
    %v533 = vunpack.c.h.b16 %v94
    %v534 = vunpack.c.l.b16 %v95
    %v535 = vunpack.c.h.b16 %v95
    %v536 = vunpack.c.l.b16 %v96
    %v537 = vunpack.c.h.b16 %v96
    %v538 = vunpack.c.l.b16 %v97
    %v539 = vunpack.c.h.b16 %v97
    %v540 = vunpack.c.l.b16 %v98
    %v541 = vunpack.c.h.b16 %v98
    %v542 = vunpack.c.l.b16 %v99
    %v543 = vunpack.c.h.b16 %v99
    %v544 = vunpack.c.l.b16 %v100
    %v545 = vunpack.c.h.b16 %v100
    %v546 = vunpack.c.l.b16 %v101
    %v547 = vunpack.c.h.b16 %v101
    %v548 = vunpack.c.l.b16 %v102
    %v549 = vunpack.c.h.b16 %v102
    %v550 = vunpack.c.l.b16 %v103
    %v551 = vunpack.c.h.b16 %v103
    %v552 = vunpack.c.l.b16 %v104
    %v553 = vunpack.c.h.b16 %v104
    %v554 = vunpack.c.l.b16 %v105
    %v555 = vunpack.c.h.b16 %v105
    %v556 = vunpack.c.l.b16 %v106
    %v557 = vunpack.c.h.b16 %v106
    %v558 = vunpack.c.l.b16 %v107
    %v559 = vunpack.c.h.b16 %v107
    %v560 = vunpack.c.l.b16 %v108
    %v561 = vunpack.c.h.b16 %v108
    %v562 = vunpack.c.l.b16 %v109
    %v563 = vunpack.c.h.b16 %v109
    %v564 = vunpack.c.l.b16 %v110
    %v565 = vunpack.c.h.b16 %v110
    %v566 = vunpack.c.l.b16 %v111
    %v567 = vunpack.c.h.b16 %v111
    %v568 = vunpack.c.l.b16 %v112
    %v569 = vunpack.c.h.b16 %v112
    %v570 = vunpack.c.l.b16 %v113
    %v571 = vunpack.c.h.b16 %v113
    %v572 = vunpack.c.l.b16 %v114
    %v573 = vunpack.c.h.b16 %v114
    %v574 = vunpack.c.l.b16 %v115
    %v575 = vunpack.c.h.b16 %v115
    %v576 = vunpack.c.l.b16 %v116
    %v577 = vunpack.c.h.b16 %v116
    %v578 = vunpack.c.l.b16 %v117
    %v579 = vunpack.c.h.b16 %v117
    %v580 = vunpack.c.l.b16 %v118
    %v581 = vunpack.c.h.b16 %v118
    %v582 = vunpack.c.l.b16 %v119
    %v583 = vunpack.c.h.b16 %v119
    %v584 = vunpack.c.l.b16 %v120
    %v585 = vunpack.c.h.b16 %v120
    %v586 = vunpack.c.l.b16 %v121
    %v587 = vunpack.c.h.b16 %v121
    %v588 = vunpack.c.l.b16 %v122
    %v589 = vunpack.c.h.b16 %v122
    %v590 = vunpack.c.l.b16 %v123
    %v591 = vunpack.c.h.b16 %v123
    %v592 = vunpack.c.l.b16 %v124
    %v593 = vunpack.c.h.b16 %v124
    %v594 = vunpack.c.l.b16 %v125
    %v595 = vunpack.c.h.b16 %v125
    %v596 = vunpack.c.l.b16 %v126
    %v597 = vunpack.c.h.b16 %v126
    %v598 = vunpack.c.l.b16 %v127
    %v599 = vunpack.c.h.b16 %v127
    %v600 = vunpack.c.l.b16 %v128
    %v601 = vunpack.c.h.b16 %v128
    %v602 = vunpack.c.l.b16 %v129
    %v603 = vunpack.c.h.b16 %v129
    %v604 = vunpack.c.l.b16 %v130
    %v605 = vunpack.c.h.b16 %v130
    %v606 = vunpack.c.l.b16 %v131
    %v607 = vunpack.c.h.b16 %v131
    %v608 = vunpack.c.l.b16 %v132
    %v609 = vunpack.c.h.b16 %v132
    %v610 = vunpack.c.l.b16 %v133
    %v611 = vunpack.c.h.b16 %v133
    %v612 = vunpack.c.l.b16 %v134
    %v613 = vunpack.c.h.b16 %v134
    %v614 = vunpack.c.l.b16 %v135
    %v615 = vunpack.c.h.b16 %v135
    %v616 = vunpack.c.l.b16 %v136
    %v617 = vunpack.c.h.b16 %v136
    %v618 = vunpack.c.l.b16 %v137
    %v619 = vunpack.c.h.b16 %v137
    %v620 = vunpack.c.l.b16 %v138
    %v621 = vunpack.c.h.b16 %v138
    %v622 = vunpack.c.l.b16 %v139
    %v623 = vunpack.c.h.b16 %v139
    %v624 = vunpack.c.l.b16 %v140
    %v625 = vunpack.c.h.b16 %v140
    %v626 = vunpack.c.l.b16 %v141
    %v627 = vunpack.c.h.b16 %v141
    %v628 = vunpack.c.l.b16 %v142
    %v629 = vunpack.c.h.b16 %v142
    %v630 = vunpack.c.l.b16 %v143
    %v631 = vunpack.c.h.b16 %v143
    %v632 = vunpack.c.l.b16 %v144
    %v633 = vunpack.c.h.b16 %v144
    %v634 = vunpack.c.l.b16 %v145
    %v635 = vunpack.c.h.b16 %v145
    %v636 = vunpack.c.l.b16 %v146
    %v637 = vunpack.c.h.b16 %v146
    %v638 = vunpack.c.l.b16 %v147
    %v639 = vunpack.c.h.b16 %v147
    %v640 = vunpack.c.l.b16 %v148
    %v641 = vunpack.c.h.b16 %v148
    %v642 = vunpack.c.l.b16 %v149
    %v643 = vunpack.c.h.b16 %v149
    %v644 = vunpack.c.l.b16 %v150
    %v645 = vunpack.c.h.b16 %v150
    %v646 = vunpack.c.l.b16 %v151
    %v647 = vunpack.c.h.b16 %v151
    %v648 = vunpack.c.l.b16 %v152
    %v649 = vunpack.c.h.b16 %v152
    %v650 = vunpack.c.l.b16 %v153
    %v651 = vunpack.c.h.b16 %v153
    %v652 = vunpack.c.l.b16 %v154
    %v653 = vunpack.c.h.b16 %v154
    %v654 = vunpack.c.l.b16 %v155
    %v655 = vunpack.c.h.b16 %v155
    %v656 = vunpack.c.l.b16 %v156
    %v657 = vunpack.c.h.b16 %v156
    %v658 = vunpack.c.l.b16 %v157
    %v659 = vunpack.c.h.b16 %v157
    %v660 = vunpack.c.l.b16 %v158
    %v661 = vunpack.c.h.b16 %v158
    %v662 = vunpack.c.l.b16 %v159
    %v663 = vunpack.c.h.b16 %v159
    %v664 = vunpack.c.l.b16 %v160
    %v665 = vunpack.c.h.b16 %v160
    %v666 = vunpack.c.l.b16 %v161
    %v667 = vunpack.c.h.b16 %v161
    %v668 = vunpack.c.l.b16 %v162
    %v669 = vunpack.c.h.b16 %v162
    %v670 = vunpack.c.l.b16 %v163
    %v671 = vunpack.c.h.b16 %v163
    %v672 = vunpack.c.l.b16 %v164
    %v673 = vunpack.c.h.b16 %v164
    %v674 = vunpack.c.l.b16 %v165
    %v675 = vunpack.c.h.b16 %v165
    %v676 = vunpack.c.l.b16 %v166
    %v677 = vunpack.c.h.b16 %v166
    %v678 = vunpack.c.l.b16 %v167
    %v679 = vunpack.c.h.b16 %v167
    %v680 = vunpack.c.l.b16 %v168
    %v681 = vunpack.c.h.b16 %v168
    %v682 = vunpack.c.l.b16 %v169
    %v683 = vunpack.c.h.b16 %v169
    %v684 = vunpack.c.l.b16 %v170
    %v685 = vunpack.c.h.b16 %v170
    %v686 = vunpack.c.l.b16 %v171
    %v687 = vunpack.c.h.b16 %v171
    %v688 = vunpack.c.l.b16 %v172
    %v689 = vunpack.c.h.b16 %v172
    %v690 = vunpack.c.l.b16 %v173
    %v691 = vunpack.c.h.b16 %v173
    %v692 = vunpack.c.l.b16 %v174
    %v693 = vunpack.c.h.b16 %v174
    %v694 = vunpack.c.l.b16 %v175
    %v695 = vunpack.c.h.b16 %v175
    %v696 = vunpack.c.l.b16 %v176
    %v697 = vunpack.c.h.b16 %v176
    %v698 = vunpack.c.l.b16 %v177
    %v699 = vunpack.c.h.b16 %v177
    %v700 = vunpack.c.l.b16 %v178
    %v701 = vunpack.c.h.b16 %v178
    %v702 = vunpack.c.l.b16 %v179
    %v703 = vunpack.c.h.b16 %v179
    %v704 = vunpack.c.l.b16 %v180
    %v705 = vunpack.c.h.b16 %v180
    %v706 = vunpack.c.l.b16 %v181
    %v707 = vunpack.c.h.b16 %v181
    %v708 = vunpack.c.l.b16 %v182
    %v709 = vunpack.c.h.b16 %v182
    %v710 = vunpack.c.l.b16 %v183
    %v711 = vunpack.c.h.b16 %v183
    %v712 = vunpack.c.l.b16 %v184
    %v713 = vunpack.c.h.b16 %v184
    %v714 = vunpack.c.l.b16 %v185
    %v715 = vunpack.c.h.b16 %v185
    %v716 = vunpack.c.l.b16 %v186
    %v717 = vunpack.c.h.b16 %v186
    %v718 = vunpack.c.l.b16 %v187
    %v719 = vunpack.c.h.b16 %v187
    %v720 = vunpack.c.l.b16 %v188
    %v721 = vunpack.c.h.b16 %v188
    %v722 = vunpack.c.l.b16 %v189
    %v723 = vunpack.c.h.b16 %v189
    %v724 = vunpack.c.l.b16 %v190
    %v725 = vunpack.c.h.b16 %v190
    %v726 = vunpack.c.l.b16 %v191
    %v727 = vunpack.c.h.b16 %v191
    %v728 = vunpack.c.l.b16 %v192
    %v729 = vunpack.c.h.b16 %v192
    %v730 = vunpack.c.l.b16 %v193
    %v731 = vunpack.c.h.b16 %v193
    %v732 = vunpack.c.l.b16 %v194
    %v733 = vunpack.c.h.b16 %v194
    %v734 = vunpack.c.l.b16 %v195
    %v735 = vunpack.c.h.b16 %v195
    %v736 = vunpack.c.l.b16 %v196
    %v737 = vunpack.c.h.b16 %v196
    %v738 = vunpack.c.l.b16 %v197
    %v739 = vunpack.c.h.b16 %v197
    %v740 = vunpack.c.l.b16 %v198
    %v741 = vunpack.c.h.b16 %v198
    %v742 = vunpack.c.l.b16 %v199
    %v743 = vunpack.c.h.b16 %v199
    %v744 = vunpack.c.l.b16 %v200
    %v745 = vunpack.c.h.b16 %v200
    %v746 = vunpack.c.l.b16 %v201
    %v747 = vunpack.c.h.b16 %v201
    %v748 = vunpack.c.l.b16 %v202
    %v749 = vunpack.c.h.b16 %v202
    %v750 = vunpack.c.l.b16 %v203
    %v751 = vunpack.c.h.b16 %v203
    %v752 = vunpack.c.l.b16 %v204
    %v753 = vunpack.c.h.b16 %v204
    %v754 = vunpack.c.l.b16 %v205
    %v755 = vunpack.c.h.b16 %v205
    %v756 = vunpack.c.l.b16 %v206
    %v757 = vunpack.c.h.b16 %v206
    %v758 = vunpack.c.l.b16 %v207
    %v759 = vunpack.c.h.b16 %v207
    %v760 = vunpack.c.l.b16 %v208
    %v761 = vunpack.c.h.b16 %v208
    %v762 = vunpack.c.l.b16 %v209
    %v763 = vunpack.c.h.b16 %v209
    %v764 = vunpack.c.l.b16 %v210
    %v765 = vunpack.c.h.b16 %v210
    %v766 = vunpack.c.l.b16 %v211
    %v767 = vunpack.c.h.b16 %v211
    %v768 = vunpack.c.l.b16 %v212
    %v769 = vunpack.c.h.b16 %v212
    %v770 = vunpack.c.l.b16 %v213
    %v771 = vunpack.c.h.b16 %v213
    %v772 = vunpack.c.l.b16 %v214
    %v773 = vunpack.c.h.b16 %v214
    %v774 = vunpack.c.l.b16 %v215
    %v775 = vunpack.c.h.b16 %v215
    %v776 = vunpack.c.l.b16 %v216
    %v777 = vunpack.c.h.b16 %v216
    %v778 = vunpack.c.l.b16 %v217
    %v779 = vunpack.c.h.b16 %v217
    %v780 = vunpack.c.l.b16 %v218
    %v781 = vunpack.c.h.b16 %v218
    %v782 = vunpack.c.l.b16 %v219
    %v783 = vunpack.c.h.b16 %v219
    %v784 = vunpack.c.l.b16 %v220
    %v785 = vunpack.c.h.b16 %v220
    %v786 = vunpack.c.l.b16 %v221
    %v787 = vunpack.c.h.b16 %v221
    %v788 = vunpack.c.l.b16 %v222
    %v789 = vunpack.c.h.b16 %v222
    %v790 = vunpack.c.l.b16 %v223
    %v791 = vunpack.c.h.b16 %v223
    %v792 = vunpack.c.l.b16 %v224
    %v793 = vunpack.c.h.b16 %v224
    %v794 = vunpack.c.l.b16 %v225
    %v795 = vunpack.c.h.b16 %v225
    %v796 = vunpack.c.l.b16 %v226
    %v797 = vunpack.c.h.b16 %v226
    %v798 = vunpack.c.l.b16 %v227
    %v799 = vunpack.c.h.b16 %v227
    %v800 = vunpack.c.l.b16 %v228
    %v801 = vunpack.c.h.b16 %v228
    %v802 = vunpack.c.l.b16 %v229
    %v803 = vunpack.c.h.b16 %v229
    %v804 = vunpack.c.l.b16 %v230
    %v805 = vunpack.c.h.b16 %v230
    %v806 = vunpack.c.l.b16 %v231
    %v807 = vunpack.c.h.b16 %v231
    %v808 = vunpack.c.l.b16 %v232
    %v809 = vunpack.c.h.b16 %v232
    %v810 = vunpack.c.l.b16 %v233
    %v811 = vunpack.c.h.b16 %v233
    %v812 = vunpack.c.l.b16 %v234
    %v813 = vunpack.c.h.b16 %v234
    %v814 = vunpack.c.l.b16 %v235
    %v815 = vunpack.c.h.b16 %v235
    %v816 = vunpack.c.l.b16 %v236
    %v817 = vunpack.c.h.b16 %v236
    %v818 = vunpack.c.l.b16 %v237
    %v819 = vunpack.c.h.b16 %v237
    %v820 = vunpack.c.l.b16 %v238
    %v821 = vunpack.c.h.b16 %v238
    %v822 = vunpack.c.l.b16 %v239
    %v823 = vunpack.c.h.b16 %v239
    %v824 = vunpack.c.l.b16 %v240
    %v825 = vunpack.c.h.b16 %v240
    %v826 = vunpack.c.l.b16 %v241
    %v827 = vunpack.c.h.b16 %v241
    %v828 = vunpack.c.l.b16 %v242
    %v829 = vunpack.c.h.b16 %v242
    %v830 = vunpack.c.l.b16 %v243
    %v831 = vunpack.c.h.b16 %v243
    %v832 = vunpack.c.l.b16 %v244
    %v833 = vunpack.c.h.b16 %v244
    %v834 = vunpack.c.l.b16 %v245
    %v835 = vunpack.c.h.b16 %v245
    %v836 = vunpack.c.l.b16 %v246
    %v837 = vunpack.c.h.b16 %v246
    %v838 = vunpack.c.l.b16 %v247
    %v839 = vunpack.c.h.b16 %v247
    %v840 = vunpack.c.l.b16 %v248
    %v841 = vunpack.c.h.b16 %v248
    %v842 = vunpack.c.l.b16 %v249
    %v843 = vunpack.c.h.b16 %v249
    %v844 = vunpack.c.l.b16 %v250
    %v845 = vunpack.c.h.b16 %v250
    %v846 = vunpack.c.l.b16 %v251
    %v847 = vunpack.c.h.b16 %v251
    %v848 = vunpack.c.l.b16 %v252
    %v849 = vunpack.c.h.b16 %v252
    %v850 = vunpack.c.l.b16 %v253
    %v851 = vunpack.c.h.b16 %v253
    %v852 = vunpack.c.l.b16 %v254
    %v853 = vunpack.c.h.b16 %v254
    %v854 = vunpack.c.l.b16 %v255
    %v855 = vunpack.c.h.b16 %v255
    %v856 = vunpack.c.l.b16 %v256
    %v857 = vunpack.c.h.b16 %v256
    %v858 = vunpack.c.l.b16 %v257
    %v859 = vunpack.c.h.b16 %v257
    %v860 = vunpack.c.l.b16 %v258
    %v861 = vunpack.c.h.b16 %v258
    %v862 = vunpack.c.l.b16 %v259
    %v863 = vunpack.c.h.b16 %v259
    %v864 = vunpack.c.l.b16 %v260
    %v865 = vunpack.c.h.b16 %v260
    %v866 = vunpack.c.l.b16 %v261
    %v867 = vunpack.c.h.b16 %v261
    %v868 = vunpack.c.l.b16 %v262
    %v869 = vunpack.c.h.b16 %v262
    %v870 = vunpack.c.l.b16 %v263
    %v871 = vunpack.c.h.b16 %v263
    %v872 = vunpack.c.l.b16 %v264
    %v873 = vunpack.c.h.b16 %v264
    %v874 = vunpack.c.l.b16 %v265
    %v875 = vunpack.c.h.b16 %v265
    %v876 = vpack.c.b16 %v488, %v484
    %v877 = vpack.c.b16 %v489, %v485
    %v878 = vpack.c.b16 %v490, %v486
    %v879 = vpack.c.b16 %v491, %v487
    %v880 = vpack.c.b16 %v496, %v492
    %v881 = vpack.c.b16 %v497, %v493
    %v882 = vpack.c.b16 %v498, %v494
    %v883 = vpack.c.b16 %v499, %v495
    %v884 = vpack.c.b16 %v504, %v500
    %v885 = vpack.c.b16 %v505, %v501
    %v886 = vpack.c.b16 %v506, %v502
    %v887 = vpack.c.b16 %v507, %v503
    %v888 = vpack.c.b16 %v512, %v508
    %v889 = vpack.c.b16 %v513, %v509
    %v890 = vpack.c.b16 %v514, %v510
    %v891 = vpack.c.b16 %v515, %v511
    %v892 = vpack.c.b16 %v520, %v516
    %v893 = vpack.c.b16 %v521, %v517
    %v894 = vpack.c.b16 %v522, %v518
    %v895 = vpack.c.b16 %v523, %v519
    %v896 = vpack.c.b16 %v528, %v524
    %v897 = vpack.c.b16 %v529, %v525
    %v898 = vpack.c.b16 %v530, %v526
    %v899 = vpack.c.b16 %v531, %v527
    %v900 = vpack.c.b16 %v536, %v532
    %v901 = vpack.c.b16 %v537, %v533
    %v902 = vpack.c.b16 %v538, %v534
    %v903 = vpack.c.b16 %v539, %v535
    %v904 = vpack.c.b16 %v544, %v540
    %v905 = vpack.c.b16 %v545, %v541
    %v906 = vpack.c.b16 %v546, %v542
    %v907 = vpack.c.b16 %v547, %v543
    %v908 = vpack.c.b16 %v552, %v548
    %v909 = vpack.c.b16 %v553, %v549
    %v910 = vpack.c.b16 %v554, %v550
    %v911 = vpack.c.b16 %v555, %v551
    %v912 = vpack.c.b16 %v560, %v556
    %v913 = vpack.c.b16 %v561, %v557
    %v914 = vpack.c.b16 %v562, %v558
    %v915 = vpack.c.b16 %v563, %v559
    %v916 = vpack.c.b16 %v568, %v564
    %v917 = vpack.c.b16 %v569, %v565
    %v918 = vpack.c.b16 %v570, %v566
    %v919 = vpack.c.b16 %v571, %v567
    %v920 = vpack.c.b16 %v576, %v572
    %v921 = vpack.c.b16 %v577, %v573
    %v922 = vpack.c.b16 %v578, %v574
    %v923 = vpack.c.b16 %v579, %v575
    %v924 = vpack.c.b16 %v584, %v580
    %v925 = vpack.c.b16 %v585, %v581
    %v926 = vpack.c.b16 %v586, %v582
    %v927 = vpack.c.b16 %v587, %v583
    %v928 = vpack.c.b16 %v592, %v588
    %v929 = vpack.c.b16 %v593, %v589
    %v930 = vpack.c.b16 %v594, %v590
    %v931 = vpack.c.b16 %v595, %v591
    %v932 = vpack.c.b16 %v600, %v596
    %v933 = vpack.c.b16 %v601, %v597
    %v934 = vpack.c.b16 %v602, %v598
    %v935 = vpack.c.b16 %v603, %v599
    %v936 = vpack.c.b16 %v608, %v604
    %v937 = vpack.c.b16 %v609, %v605
    %v938 = vpack.c.b16 %v610, %v606
    %v939 = vpack.c.b16 %v611, %v607
    %v940 = vpack.c.b16 %v616, %v612
    %v941 = vpack.c.b16 %v617, %v613
    %v942 = vpack.c.b16 %v618, %v614
    %v943 = vpack.c.b16 %v619, %v615
    %v944 = vpack.c.b16 %v624, %v620
    %v945 = vpack.c.b16 %v625, %v621
    %v946 = vpack.c.b16 %v626, %v622
    %v947 = vpack.c.b16 %v627, %v623
    %v948 = vpack.c.b16 %v632, %v628
    %v949 = vpack.c.b16 %v633, %v629
    %v950 = vpack.c.b16 %v634, %v630
    %v951 = vpack.c.b16 %v635, %v631
    %v952 = vpack.c.b16 %v640, %v636
    %v953 = vpack.c.b16 %v641, %v637
    %v954 = vpack.c.b16 %v642, %v638
    %v955 = vpack.c.b16 %v643, %v639
    %v956 = vpack.c.b16 %v648, %v644
    %v957 = vpack.c.b16 %v649, %v645
    %v958 = vpack.c.b16 %v650, %v646
    %v959 = vpack.c.b16 %v651, %v647
    %v960 = vpack.c.b16 %v656, %v652
    %v961 = vpack.c.b16 %v657, %v653
    %v962 = vpack.c.b16 %v658, %v654
    %v963 = vpack.c.b16 %v659, %v655
    %v964 = vpack.c.b16 %v664, %v660
    %v965 = vpack.c.b16 %v665, %v661
    %v966 = vpack.c.b16 %v666, %v662
    %v967 = vpack.c.b16 %v667, %v663
    %v968 = vpack.c.b16 %v672, %v668
    %v969 = vpack.c.b16 %v673, %v669
    %v970 = vpack.c.b16 %v674, %v670
    %v971 = vpack.c.b16 %v675, %v671
    %v972 = vpack.c.b16 %v680, %v676
    %v973 = vpack.c.b16 %v681, %v677
    %v974 = vpack.c.b16 %v682, %v678
    %v975 = vpack.c.b16 %v683, %v679
    %v976 = vpack.c.b16 %v688, %v684
    %v977 = vpack.c.b16 %v689, %v685
    %v978 = vpack.c.b16 %v690, %v686
    %v979 = vpack.c.b16 %v691, %v687
    %v980 = vpack.c.b16 %v696, %v692
    %v981 = vpack.c.b16 %v697, %v693
    %v982 = vpack.c.b16 %v698, %v694
    %v983 = vpack.c.b16 %v699, %v695
    %v984 = vpack.c.b16 %v704, %v700
    %v985 = vpack.c.b16 %v705, %v701
    %v986 = vpack.c.b16 %v706, %v702
    %v987 = vpack.c.b16 %v707, %v703
    %v988 = vpack.c.b16 %v712, %v708
    %v989 = vpack.c.b16 %v713, %v709
    %v990 = vpack.c.b16 %v714, %v710
    %v991 = vpack.c.b16 %v715, %v711
    %v992 = vpack.c.b16 %v720, %v716
    %v993 = vpack.c.b16 %v721, %v717
    %v994 = vpack.c.b16 %v722, %v718
    %v995 = vpack.c.b16 %v723, %v719
    %v996 = vpack.c.b16 %v728, %v724
    %v997 = vpack.c.b16 %v729, %v725
    %v998 = vpack.c.b16 %v730, %v726
    %v999 = vpack.c.b16 %v731, %v727
    %v1000 = vpack.c.b16 %v736, %v732
    %v1001 = vpack.c.b16 %v737, %v733
    %v1002 = vpack.c.b16 %v738, %v734
    %v1003 = vpack.c.b16 %v739, %v735
    %v1004 = vpack.c.b16 %v744, %v740
    %v1005 = vpack.c.b16 %v745, %v741
    %v1006 = vpack.c.b16 %v746, %v742
    %v1007 = vpack.c.b16 %v747, %v743
    %v1008 = vpack.c.b16 %v752, %v748
    %v1009 = vpack.c.b16 %v753, %v749
    %v1010 = vpack.c.b16 %v754, %v750
    %v1011 = vpack.c.b16 %v755, %v751
    %v1012 = vpack.c.b16 %v760, %v756
    %v1013 = vpack.c.b16 %v761, %v757
    %v1014 = vpack.c.b16 %v762, %v758
    %v1015 = vpack.c.b16 %v763, %v759
    %v1016 = vpack.c.b16 %v768, %v764
    %v1017 = vpack.c.b16 %v769, %v765
    %v1018 = vpack.c.b16 %v770, %v766
    %v1019 = vpack.c.b16 %v771, %v767
    %v1020 = vpack.c.b16 %v776, %v772
    %v1021 = vpack.c.b16 %v777, %v773
    %v1022 = vpack.c.b16 %v778, %v774
    %v1023 = vpack.c.b16 %v779, %v775
    %v1024 = vpack.c.b16 %v784, %v780
    %v1025 = vpack.c.b16 %v785, %v781
    %v1026 = vpack.c.b16 %v786, %v782
    %v1027 = vpack.c.b16 %v787, %v783
    %v1028 = vpack.c.b16 %v792, %v788
    %v1029 = vpack.c.b16 %v793, %v789
    %v1030 = vpack.c.b16 %v794, %v790
    %v1031 = vpack.c.b16 %v795, %v791
    %v1032 = vpack.c.b16 %v800, %v796
    %v1033 = vpack.c.b16 %v801, %v797
    %v1034 = vpack.c.b16 %v802, %v798
    %v1035 = vpack.c.b16 %v803, %v799
    %v1036 = vpack.c.b16 %v808, %v804
    %v1037 = vpack.c.b16 %v809, %v805
    %v1038 = vpack.c.b16 %v810, %v806
    %v1039 = vpack.c.b16 %v811, %v807
    %v1040 = vpack.c.b16 %v816, %v812
    %v1041 = vpack.c.b16 %v817, %v813
    %v1042 = vpack.c.b16 %v818, %v814
    %v1043 = vpack.c.b16 %v819, %v815
    %v1044 = vpack.c.b16 %v824, %v820
    %v1045 = vpack.c.b16 %v825, %v821
    %v1046 = vpack.c.b16 %v826, %v822
    %v1047 = vpack.c.b16 %v827, %v823
    %v1048 = vpack.c.b16 %v832, %v828
    %v1049 = vpack.c.b16 %v833, %v829
    %v1050 = vpack.c.b16 %v834, %v830
    %v1051 = vpack.c.b16 %v835, %v831
    %v1052 = vpack.c.b16 %v840, %v836
    %v1053 = vpack.c.b16 %v841, %v837
    %v1054 = vpack.c.b16 %v842, %v838
    %v1055 = vpack.c.b16 %v843, %v839
    %v1056 = vpack.c.b16 %v848, %v844
    %v1057 = vpack.c.b16 %v849, %v845
    %v1058 = vpack.c.b16 %v850, %v846
    %v1059 = vpack.c.b16 %v851, %v847
    %v1060 = vpack.c.b16 %v856, %v852
    %v1061 = vpack.c.b16 %v857, %v853
    %v1062 = vpack.c.b16 %v858, %v854
    %v1063 = vpack.c.b16 %v859, %v855
    %v1064 = vpack.c.b16 %v864, %v860
    %v1065 = vpack.c.b16 %v865, %v861
    %v1066 = vpack.c.b16 %v866, %v862
    %v1067 = vpack.c.b16 %v867, %v863
    %v1068 = vpack.c.b16 %v872, %v868
    %v1069 = vpack.c.b16 %v873, %v869
    %v1070 = vpack.c.b16 %v874, %v870
    %v1071 = vpack.c.b16 %v875, %v871
    %vm1268 = vcmask 130048
    %v1270 = vsel %vm1268, %v69, 0
    %1272 = vmatprep.subr.bf16.mxu0 %v905
    %1273 = vmatpush1.bf16.msra.mxu0 %v904
    %1274 = vmatprep.subr.bf16.mxu0 %v901
    %1275 = vmatpush1.bf16.msra.mxu0 %v900
    %1276 = vmatprep.subr.bf16.mxu0 %v897
    %1277 = vmatpush1.bf16.msra.mxu0 %v896
    %1278 = vmatprep.subr.bf16.mxu0 %v893
    %1279 = vmatpush1.bf16.msra.mxu0 %v892
    %1280 = vmatprep.subr.bf16.mxu0 %v889
    %1281 = vmatpush1.bf16.msra.mxu0 %v888
    %1282 = vmatprep.subr.bf16.mxu0 %v885
    %1283 = vmatpush1.bf16.msra.mxu0 %v884
    %1284 = vmatprep.subr.bf16.mxu0 %v881
    %1285 = vmatpush1.bf16.msra.mxu0 %v880
    %1286 = vmatprep.subr.bf16.mxu0 %v877
    %1287 = vmatpush1.bf16.msra.mxu0 %v876
    %1288 = vmatprep.subr.bf16.mxu0 %v937
    %1289 = vmatpush2.bf16.msra.mxu0 %v936
    %1290 = vmatprep.subr.bf16.mxu0 %v933
    %1291 = vmatpush2.bf16.msra.mxu0 %v932
    %1292 = vmatprep.subr.bf16.mxu0 %v929
    %1293 = vmatpush2.bf16.msra.mxu0 %v928
    %1294 = vmatprep.subr.bf16.mxu0 %v925
    %1295 = vmatpush2.bf16.msra.mxu0 %v924
    %1296 = vmatprep.subr.bf16.mxu0 %v921
    %1297 = vmatpush2.bf16.msra.mxu0 %v920
    %1298 = vmatprep.subr.bf16.mxu0 %v917
    %1299 = vmatpush2.bf16.msra.mxu0 %v916
    %1300 = vmatprep.subr.bf16.mxu0 %v913
    %1301 = vmatpush2.bf16.msra.mxu0 %v912
    %1302 = vmatprep.subr.bf16.mxu0 %v909
    %1303 = vmatpush2.bf16.msra.mxu0 %v908
    %1304 = vmatprep.mubr.bf16.mxu0 %v64
    %1305 = vmatmul.mubr.bf16.gmra.mxu0 %v63
    %v1306 = vpop.f32.mrf.mxu0
    %v1307 = vadd.f32 %v271, %v1306
    %v1308 = vpop.f32.mrf.mxu0
    %v1309 = vadd.f32 %v275, %v1308
    %v1310 = vpop.f32.mrf.mxu0
    %v1311 = vpop.f32.mrf.mxu0
    %1312 = vdwg.mxu0
    %1313 = vmatprep.subr.bf16.mxu0 %v969
    %1314 = vmatpush1.bf16.msra.mxu0 %v968
    %1315 = vmatprep.subr.bf16.mxu0 %v965
    %1316 = vmatpush1.bf16.msra.mxu0 %v964
    %1317 = vmatprep.subr.bf16.mxu0 %v961
    %1318 = vmatpush1.bf16.msra.mxu0 %v960
    %1319 = vmatprep.subr.bf16.mxu0 %v957
    %1320 = vmatpush1.bf16.msra.mxu0 %v956
    %1321 = vmatprep.subr.bf16.mxu0 %v953
    %1322 = vmatpush1.bf16.msra.mxu0 %v952
    %1323 = vmatprep.subr.bf16.mxu0 %v949
    %1324 = vmatpush1.bf16.msra.mxu0 %v948
    %1325 = vmatprep.subr.bf16.mxu0 %v945
    %1326 = vmatpush1.bf16.msra.mxu0 %v944
    %1327 = vmatprep.subr.bf16.mxu0 %v941
    %1328 = vmatpush1.bf16.msra.mxu0 %v940
    %1329 = vmatprep.subr.bf16.mxu0 %v1001
    %1330 = vmatpush2.bf16.msra.mxu0 %v1000
    %1331 = vmatprep.subr.bf16.mxu0 %v997
    %1332 = vmatpush2.bf16.msra.mxu0 %v996
    %1333 = vmatprep.subr.bf16.mxu0 %v993
    %1334 = vmatpush2.bf16.msra.mxu0 %v992
    %1335 = vmatprep.subr.bf16.mxu0 %v989
    %1336 = vmatpush2.bf16.msra.mxu0 %v988
    %1337 = vmatprep.subr.bf16.mxu0 %v985
    %1338 = vmatpush2.bf16.msra.mxu0 %v984
    %1339 = vmatprep.subr.bf16.mxu0 %v981
    %1340 = vmatpush2.bf16.msra.mxu0 %v980
    %1341 = vmatprep.subr.bf16.mxu0 %v977
    %1342 = vmatpush2.bf16.msra.mxu0 %v976
    %1343 = vmatprep.subr.bf16.mxu0 %v973
    %1344 = vmatpush2.bf16.msra.mxu0 %v972
    %1345 = vmatprep.mubr.bf16.mxu0 %v66
    %1346 = vmatmul.mubr.bf16.gmra.mxu0 %v65
    %v1347 = vpop.f32.mrf.mxu0
    %v1348 = vadd.f32 %v1307, %v1347
    %v1349 = vpop.f32.mrf.mxu0
    %v1350 = vadd.f32 %v1309, %v1349
    %v1351 = vpop.f32.mrf.mxu0
    %v1352 = vpop.f32.mrf.mxu0
    %1353 = vdwg.mxu0
    %1354 = vmatprep.subr.bf16.mxu0 %v1033
    %1355 = vmatpush1.bf16.msra.mxu0 %v1032
    %1356 = vmatprep.subr.bf16.mxu0 %v1029
    %1357 = vmatpush1.bf16.msra.mxu0 %v1028
    %1358 = vmatprep.subr.bf16.mxu0 %v1025
    %1359 = vmatpush1.bf16.msra.mxu0 %v1024
    %1360 = vmatprep.subr.bf16.mxu0 %v1021
    %1361 = vmatpush1.bf16.msra.mxu0 %v1020
    %1362 = vmatprep.subr.bf16.mxu0 %v1017
    %1363 = vmatpush1.bf16.msra.mxu0 %v1016
    %1364 = vmatprep.subr.bf16.mxu0 %v1013
    %1365 = vmatpush1.bf16.msra.mxu0 %v1012
    %1366 = vmatprep.subr.bf16.mxu0 %v1009
    %1367 = vmatpush1.bf16.msra.mxu0 %v1008
    %1368 = vmatprep.subr.bf16.mxu0 %v1005
    %1369 = vmatpush1.bf16.msra.mxu0 %v1004
    %1370 = vmatprep.subr.bf16.mxu0 %v1065
    %1371 = vmatpush2.bf16.msra.mxu0 %v1064
    %1372 = vmatprep.subr.bf16.mxu0 %v1061
    %1373 = vmatpush2.bf16.msra.mxu0 %v1060
    %1374 = vmatprep.subr.bf16.mxu0 %v1057
    %1375 = vmatpush2.bf16.msra.mxu0 %v1056
    %1376 = vmatprep.subr.bf16.mxu0 %v1053
    %1377 = vmatpush2.bf16.msra.mxu0 %v1052
    %1378 = vmatprep.subr.bf16.mxu0 %v1049
    %1379 = vmatpush2.bf16.msra.mxu0 %v1048
    %1380 = vmatprep.subr.bf16.mxu0 %v1045
    %1381 = vmatpush2.bf16.msra.mxu0 %v1044
    %1382 = vmatprep.subr.bf16.mxu0 %v1041
    %1383 = vmatpush2.bf16.msra.mxu0 %v1040
    %1384 = vmatprep.subr.bf16.mxu0 %v1037
    %1385 = vmatpush2.bf16.msra.mxu0 %v1036
    %1386 = vmatprep.mubr.bf16.mxu0 %v68
    %1387 = vmatmul.mubr.bf16.gmra.mxu0 %v67
    %v1388 = vpop.f32.mrf.mxu0
    %v1389 = vadd.f32 %v1348, %v1388
    %v1390 = vpop.f32.mrf.mxu0
    %v1391 = vadd.f32 %v1350, %v1390
    %v1392 = vpop.f32.mrf.mxu0
    %v1393 = vpop.f32.mrf.mxu0
    %1394 = vdwg.mxu0
    %1395 = vmatprep.subr.bf16.mxu0 0
    %1396 = vmatpush1.bf16.msra.mxu0 0
    %1397 = vmatprep.subr.bf16.mxu0 0
    %1398 = vmatpush1.bf16.msra.mxu0 0
    %1399 = vmatprep.subr.bf16.mxu0 0
    %1400 = vmatpush1.bf16.msra.mxu0 0
    %1401 = vmatprep.subr.bf16.mxu0 0
    %1402 = vmatpush1.bf16.msra.mxu0 0
    %1403 = vmatprep.subr.bf16.mxu0 0
    %1404 = vmatpush1.bf16.msra.mxu0 0
    %1405 = vmatprep.subr.bf16.mxu0 0
    %1406 = vmatpush1.bf16.msra.mxu0 0
    %1407 = vmatprep.subr.bf16.mxu0 0
    %1408 = vmatpush1.bf16.msra.mxu0 0
    %1409 = vmatprep.subr.bf16.mxu0 %v1069
    %1410 = vmatpush1.bf16.msra.mxu0 %v1068
    %1411 = vmatprep.subr.bf16.mxu0 0
    %1412 = vmatpush2.bf16.msra.mxu0 0
    %1413 = vmatprep.subr.bf16.mxu0 0
    %1414 = vmatpush2.bf16.msra.mxu0 0
    %1415 = vmatprep.subr.bf16.mxu0 0
    %1416 = vmatpush2.bf16.msra.mxu0 0
    %1417 = vmatprep.subr.bf16.mxu0 0
    %1418 = vmatpush2.bf16.msra.mxu0 0
    %1419 = vmatprep.subr.bf16.mxu0 0
    %1420 = vmatpush2.bf16.msra.mxu0 0
    %1421 = vmatprep.subr.bf16.mxu0 0
    %1422 = vmatpush2.bf16.msra.mxu0 0
    %1423 = vmatprep.subr.bf16.mxu0 0
    %1424 = vmatpush2.bf16.msra.mxu0 0
    %1425 = vmatprep.subr.bf16.mxu0 0
    %1426 = vmatpush2.bf16.msra.mxu0 0
    %1427 = vmatprep.mubr.bf16.mxu0 0
    %1428 = vmatmul.mubr.bf16.gmra.mxu0 %v1270
    %v1429 = vpop.f32.mrf.mxu0
    %v1430 = vadd.f32 %v1389, %v1429
    %v1431 = vpop.f32.mrf.mxu0
    %v1432 = vadd.f32 %v1391, %v1431
    %v1433 = vpop.f32.mrf.mxu0
    %v1434 = vpop.f32.mrf.mxu0
    %1435 = vdwg.mxu0
    %1436 = vmatprep.subr.bf16.mxu0 %v907
    %1437 = vmatpush1.bf16.msra.mxu0 %v906
    %1438 = vmatprep.subr.bf16.mxu0 %v903
    %1439 = vmatpush1.bf16.msra.mxu0 %v902
    %1440 = vmatprep.subr.bf16.mxu0 %v899
    %1441 = vmatpush1.bf16.msra.mxu0 %v898
    %1442 = vmatprep.subr.bf16.mxu0 %v895
    %1443 = vmatpush1.bf16.msra.mxu0 %v894
    %1444 = vmatprep.subr.bf16.mxu0 %v891
    %1445 = vmatpush1.bf16.msra.mxu0 %v890
    %1446 = vmatprep.subr.bf16.mxu0 %v887
    %1447 = vmatpush1.bf16.msra.mxu0 %v886
    %1448 = vmatprep.subr.bf16.mxu0 %v883
    %1449 = vmatpush1.bf16.msra.mxu0 %v882
    %1450 = vmatprep.subr.bf16.mxu0 %v879
    %1451 = vmatpush1.bf16.msra.mxu0 %v878
    %1452 = vmatprep.subr.bf16.mxu0 %v939
    %1453 = vmatpush2.bf16.msra.mxu0 %v938
    %1454 = vmatprep.subr.bf16.mxu0 %v935
    %1455 = vmatpush2.bf16.msra.mxu0 %v934
    %1456 = vmatprep.subr.bf16.mxu0 %v931
    %1457 = vmatpush2.bf16.msra.mxu0 %v930
    %1458 = vmatprep.subr.bf16.mxu0 %v927
    %1459 = vmatpush2.bf16.msra.mxu0 %v926
    %1460 = vmatprep.subr.bf16.mxu0 %v923
    %1461 = vmatpush2.bf16.msra.mxu0 %v922
    %1462 = vmatprep.subr.bf16.mxu0 %v919
    %1463 = vmatpush2.bf16.msra.mxu0 %v918
    %1464 = vmatprep.subr.bf16.mxu0 %v915
    %1465 = vmatpush2.bf16.msra.mxu0 %v914
    %1466 = vmatprep.subr.bf16.mxu0 %v911
    %1467 = vmatpush2.bf16.msra.mxu0 %v910
    %1468 = vmatprep.mubr.bf16.mxu0 %v64
    %1469 = vmatmul.mubr.bf16.gmra.mxu0 %v63
    %v1470 = vpop.f32.mrf.mxu0
    %v1471 = vadd.f32 %v279, %v1470
    %v1472 = vpop.f32.mrf.mxu0
    %v1473 = vadd.f32 %v283, %v1472
    %v1474 = vpop.f32.mrf.mxu0
    %v1475 = vpop.f32.mrf.mxu0
    %1476 = vdwg.mxu0
    %1477 = vmatprep.subr.bf16.mxu0 %v971
    %1478 = vmatpush1.bf16.msra.mxu0 %v970
    %1479 = vmatprep.subr.bf16.mxu0 %v967
    %1480 = vmatpush1.bf16.msra.mxu0 %v966
    %1481 = vmatprep.subr.bf16.mxu0 %v963
    %1482 = vmatpush1.bf16.msra.mxu0 %v962
    %1483 = vmatprep.subr.bf16.mxu0 %v959
    %1484 = vmatpush1.bf16.msra.mxu0 %v958
    %1485 = vmatprep.subr.bf16.mxu0 %v955
    %1486 = vmatpush1.bf16.msra.mxu0 %v954
    %1487 = vmatprep.subr.bf16.mxu0 %v951
    %1488 = vmatpush1.bf16.msra.mxu0 %v950
    %1489 = vmatprep.subr.bf16.mxu0 %v947
    %1490 = vmatpush1.bf16.msra.mxu0 %v946
    %1491 = vmatprep.subr.bf16.mxu0 %v943
    %1492 = vmatpush1.bf16.msra.mxu0 %v942
    %1493 = vmatprep.subr.bf16.mxu0 %v1003
    %1494 = vmatpush2.bf16.msra.mxu0 %v1002
    %1495 = vmatprep.subr.bf16.mxu0 %v999
    %1496 = vmatpush2.bf16.msra.mxu0 %v998
    %1497 = vmatprep.subr.bf16.mxu0 %v995
    %1498 = vmatpush2.bf16.msra.mxu0 %v994
    %1499 = vmatprep.subr.bf16.mxu0 %v991
    %1500 = vmatpush2.bf16.msra.mxu0 %v990
    %1501 = vmatprep.subr.bf16.mxu0 %v987
    %1502 = vmatpush2.bf16.msra.mxu0 %v986
    %1503 = vmatprep.subr.bf16.mxu0 %v983
    %1504 = vmatpush2.bf16.msra.mxu0 %v982
    %1505 = vmatprep.subr.bf16.mxu0 %v979
    %1506 = vmatpush2.bf16.msra.mxu0 %v978
    %1507 = vmatprep.subr.bf16.mxu0 %v975
    %1508 = vmatpush2.bf16.msra.mxu0 %v974
    %1509 = vmatprep.mubr.bf16.mxu0 %v66
    %1510 = vmatmul.mubr.bf16.gmra.mxu0 %v65
    %v1511 = vpop.f32.mrf.mxu0
    %v1512 = vadd.f32 %v1471, %v1511
    %v1513 = vpop.f32.mrf.mxu0
    %v1514 = vadd.f32 %v1473, %v1513
    %v1515 = vpop.f32.mrf.mxu0
    %v1516 = vpop.f32.mrf.mxu0
    %1517 = vdwg.mxu0
    %1518 = vmatprep.subr.bf16.mxu0 %v1035
    %1519 = vmatpush1.bf16.msra.mxu0 %v1034
    %1520 = vmatprep.subr.bf16.mxu0 %v1031
    %1521 = vmatpush1.bf16.msra.mxu0 %v1030
    %1522 = vmatprep.subr.bf16.mxu0 %v1027
    %1523 = vmatpush1.bf16.msra.mxu0 %v1026
    %1524 = vmatprep.subr.bf16.mxu0 %v1023
    %1525 = vmatpush1.bf16.msra.mxu0 %v1022
    %1526 = vmatprep.subr.bf16.mxu0 %v1019
    %1527 = vmatpush1.bf16.msra.mxu0 %v1018
    %1528 = vmatprep.subr.bf16.mxu0 %v1015
    %1529 = vmatpush1.bf16.msra.mxu0 %v1014
    %1530 = vmatprep.subr.bf16.mxu0 %v1011
    %1531 = vmatpush1.bf16.msra.mxu0 %v1010
    %1532 = vmatprep.subr.bf16.mxu0 %v1007
    %1533 = vmatpush1.bf16.msra.mxu0 %v1006
    %1534 = vmatprep.subr.bf16.mxu0 %v1067
    %1535 = vmatpush2.bf16.msra.mxu0 %v1066
    %1536 = vmatprep.subr.bf16.mxu0 %v1063
    %1537 = vmatpush2.bf16.msra.mxu0 %v1062
    %1538 = vmatprep.subr.bf16.mxu0 %v1059
    %1539 = vmatpush2.bf16.msra.mxu0 %v1058
    %1540 = vmatprep.subr.bf16.mxu0 %v1055
    %1541 = vmatpush2.bf16.msra.mxu0 %v1054
    %1542 = vmatprep.subr.bf16.mxu0 %v1051
    %1543 = vmatpush2.bf16.msra.mxu0 %v1050
    %1544 = vmatprep.subr.bf16.mxu0 %v1047
    %1545 = vmatpush2.bf16.msra.mxu0 %v1046
    %1546 = vmatprep.subr.bf16.mxu0 %v1043
    %1547 = vmatpush2.bf16.msra.mxu0 %v1042
    %1548 = vmatprep.subr.bf16.mxu0 %v1039
    %1549 = vmatpush2.bf16.msra.mxu0 %v1038
    %1550 = vmatprep.mubr.bf16.mxu0 %v68
    %1551 = vmatmul.mubr.bf16.gmra.mxu0 %v67
    %v1552 = vpop.f32.mrf.mxu0
    %v1553 = vadd.f32 %v1512, %v1552
    %v1554 = vpop.f32.mrf.mxu0
    %v1555 = vadd.f32 %v1514, %v1554
    %v1556 = vpop.f32.mrf.mxu0
    %v1557 = vpop.f32.mrf.mxu0
    %1558 = vdwg.mxu0
    %1559 = vmatprep.subr.bf16.mxu0 0
    %1560 = vmatpush1.bf16.msra.mxu0 0
    %1561 = vmatprep.subr.bf16.mxu0 0
    %1562 = vmatpush1.bf16.msra.mxu0 0
    %1563 = vmatprep.subr.bf16.mxu0 0
    %1564 = vmatpush1.bf16.msra.mxu0 0
    %1565 = vmatprep.subr.bf16.mxu0 0
    %1566 = vmatpush1.bf16.msra.mxu0 0
    %1567 = vmatprep.subr.bf16.mxu0 0
    %1568 = vmatpush1.bf16.msra.mxu0 0
    %1569 = vmatprep.subr.bf16.mxu0 0
    %1570 = vmatpush1.bf16.msra.mxu0 0
    %1571 = vmatprep.subr.bf16.mxu0 0
    %1572 = vmatpush1.bf16.msra.mxu0 0
    %1573 = vmatprep.subr.bf16.mxu0 %v1071
    %1574 = vmatpush1.bf16.msra.mxu0 %v1070
    %1575 = vmatprep.subr.bf16.mxu0 0
    %1576 = vmatpush2.bf16.msra.mxu0 0
    %1577 = vmatprep.subr.bf16.mxu0 0
    %1578 = vmatpush2.bf16.msra.mxu0 0
    %1579 = vmatprep.subr.bf16.mxu0 0
    %1580 = vmatpush2.bf16.msra.mxu0 0
    %1581 = vmatprep.subr.bf16.mxu0 0
    %1582 = vmatpush2.bf16.msra.mxu0 0
    %1583 = vmatprep.subr.bf16.mxu0 0
    %1584 = vmatpush2.bf16.msra.mxu0 0
    %1585 = vmatprep.subr.bf16.mxu0 0
    %1586 = vmatpush2.bf16.msra.mxu0 0
    %1587 = vmatprep.subr.bf16.mxu0 0
    %1588 = vmatpush2.bf16.msra.mxu0 0
    %1589 = vmatprep.subr.bf16.mxu0 0
    %1590 = vmatpush2.bf16.msra.mxu0 0
    %1591 = vmatprep.mubr.bf16.mxu0 0
    %1592 = vmatmul.mubr.bf16.gmra.mxu0 %v1270
    %v1593 = vpop.f32.mrf.mxu0
    %v1594 = vadd.f32 %v1553, %v1593
    %v1595 = vpop.f32.mrf.mxu0
    %v1596 = vadd.f32 %v1555, %v1595
    %v1597 = vpop.f32.mrf.mxu0
    %v1598 = vpop.f32.mrf.mxu0
    %1599 = vdwg.mxu0
    %v1600 = vmax.f32 %v1430, 0.0
    %v1601 = vmax.f32 %v1432, 0.0
    %v1602 = vmax.f32 %v1594, 0.0
    %v1603 = vmax.f32 %v1596, 0.0
    %v1604 = vpack.c.bf16 %v1600, %v1600
    %v1605 = vpack.c.bf16 %v1601, %v1601
    %v1606 = vpack.c.bf16 %v1602, %v1602
    %v1607 = vpack.c.bf16 %v1603, %v1603
    %v1608 = vld [vmem:[#allocation5] sm:$0xff]
    %v1609 = vld [vmem:[#allocation5 + $0x8] sm:$0xff]
    %v1610 = vld [vmem:[#allocation5 + $0x10] sm:$0xff]
    %v1611 = vld [vmem:[#allocation5 + $0x18] sm:$0xff]
    %v1612 = vld [vmem:[#allocation5 + $0x20] sm:$0xff]
    %v1613 = vld [vmem:[#allocation5 + $0x28] sm:$0xff]
    %v1614 = vld [vmem:[#allocation5 + $0x30] sm:$0xff]
    %v1615 = vld [vmem:[#allocation5 + $0x38] sm:$0xff]
    %v1616 = vld [vmem:[#allocation5 + $0x40] sm:$0xff]
    %v1617 = vld [vmem:[#allocation5 + $0x48] sm:$0xff]
    %v1618 = vld [vmem:[#allocation5 + $0x50] sm:$0xff]
    %v1619 = vld [vmem:[#allocation5 + $0x58] sm:$0xff]
    %v1620 = vld [vmem:[#allocation5 + $0x60] sm:$0xff]
    %v1621 = vld [vmem:[#allocation5 + $0x68] sm:$0xff]
    %v1622 = vld [vmem:[#allocation5 + $0x70] sm:$0xff]
    %v1623 = vld [vmem:[#allocation5 + $0x78] sm:$0xff]
    %v1624 = vld [vmem:[#allocation5 + $0x80] sm:$0xff]
    %v1625 = vld [vmem:[#allocation5 + $0x88] sm:$0xff]
    %v1626 = vld [vmem:[#allocation5 + $0x90] sm:$0xff]
    %v1627 = vld [vmem:[#allocation5 + $0x98] sm:$0xff]
    %v1628 = vld [vmem:[#allocation5 + $0xa0] sm:$0xff]
    %v1629 = vld [vmem:[#allocation5 + $0xa8] sm:$0xff]
    %v1630 = vld [vmem:[#allocation5 + $0xb0] sm:$0xff]
    %v1631 = vld [vmem:[#allocation5 + $0xb8] sm:$0xff]
    %v1632 = vld [vmem:[#allocation5 + $0xc0] sm:$0xff]
    %v1633 = vld [vmem:[#allocation5 + $0xc8] sm:$0xff]
    %v1634 = vld [vmem:[#allocation5 + $0xd0] sm:$0xff]
    %v1635 = vld [vmem:[#allocation5 + $0xd8] sm:$0xff]
    %v1636 = vld [vmem:[#allocation5 + $0xe0] sm:$0xff]
    %v1637 = vld [vmem:[#allocation5 + $0xe8] sm:$0xff]
    %v1638 = vld [vmem:[#allocation5 + $0xf0] sm:$0xff]
    %v1639 = vld [vmem:[#allocation5 + $0xf8] sm:$0xff]
    %v1640 = vld [vmem:[#allocation5 + $0x100] sm:$0xff]
    %v1641 = vld [vmem:[#allocation5 + $0x108] sm:$0xff]
    %v1642 = vld [vmem:[#allocation5 + $0x110] sm:$0xff]
    %v1643 = vld [vmem:[#allocation5 + $0x118] sm:$0xff]
    %v1644 = vld [vmem:[#allocation5 + $0x120] sm:$0xff]
    %v1645 = vld [vmem:[#allocation5 + $0x128] sm:$0xff]
    %v1646 = vld [vmem:[#allocation5 + $0x130] sm:$0xff]
    %v1647 = vld [vmem:[#allocation5 + $0x138] sm:$0xff]
    %v1648 = vld [vmem:[#allocation5 + $0x140] sm:$0xff]
    %v1649 = vld [vmem:[#allocation5 + $0x148] sm:$0xff]
    %v1650 = vld [vmem:[#allocation5 + $0x150] sm:$0xff]
    %v1651 = vld [vmem:[#allocation5 + $0x158] sm:$0xff]
    %v1652 = vld [vmem:[#allocation5 + $0x160] sm:$0xff]
    %v1653 = vld [vmem:[#allocation5 + $0x168] sm:$0xff]
    %v1654 = vld [vmem:[#allocation5 + $0x170] sm:$0xff]
    %v1655 = vld [vmem:[#allocation5 + $0x178] sm:$0xff]
    %v1656 = vld [vmem:[#allocation5 + $0x180] sm:$0xff]
    %v1657 = vld [vmem:[#allocation5 + $0x188] sm:$0xff]
    %v1658 = vld [vmem:[#allocation5 + $0x190] sm:$0xff]
    %v1659 = vld [vmem:[#allocation5 + $0x198] sm:$0xff]
    %v1660 = vld [vmem:[#allocation5 + $0x1a0] sm:$0xff]
    %v1661 = vld [vmem:[#allocation5 + $0x1a8] sm:$0xff]
    %v1662 = vld [vmem:[#allocation5 + $0x1b0] sm:$0xff]
    %v1663 = vld [vmem:[#allocation5 + $0x1b8] sm:$0xff]
    %v1664 = vld [vmem:[#allocation5 + $0x1c0] sm:$0xff]
    %v1665 = vld [vmem:[#allocation5 + $0x1c8] sm:$0xff]
    %v1666 = vld [vmem:[#allocation5 + $0x1d0] sm:$0xff]
    %v1667 = vld [vmem:[#allocation5 + $0x1d8] sm:$0xff]
    %v1668 = vld [vmem:[#allocation5 + $0x1e0] sm:$0xff]
    %v1669 = vld [vmem:[#allocation5 + $0x1e8] sm:$0xff]
    %v1670 = vld [vmem:[#allocation5 + $0x1f0] sm:$0xff]
    %v1671 = vld [vmem:[#allocation5 + $0x1f8] sm:$0xff]
    %v1672 = vld [vmem:[%s4] sm:$0x3]
    %v1674 = vlaneseq
    %v1675 = vshrl.u32 %v1674, 7
    %v1676 = vsub.s32 0, %v1675
    %v1677 = vrot.slane %v1672, %v1676
    %v1678 = vlaneseq
    %v1679 = vshrl.u32 %v1678, 7
    %v1680 = vsub.s32 1, %v1679
    %v1681 = vrot.slane %v1672, %v1680
    %v1748 = vunpack.c.l.b16 %v1608
    %v1749 = vunpack.c.h.b16 %v1608
    %v1750 = vunpack.c.l.b16 %v1609
    %v1751 = vunpack.c.h.b16 %v1609
    %v1752 = vunpack.c.l.b16 %v1610
    %v1753 = vunpack.c.h.b16 %v1610
    %v1754 = vunpack.c.l.b16 %v1611
    %v1755 = vunpack.c.h.b16 %v1611
    %v1756 = vunpack.c.l.b16 %v1612
    %v1757 = vunpack.c.h.b16 %v1612
    %v1758 = vunpack.c.l.b16 %v1613
    %v1759 = vunpack.c.h.b16 %v1613
    %v1760 = vunpack.c.l.b16 %v1614
    %v1761 = vunpack.c.h.b16 %v1614
    %v1762 = vunpack.c.l.b16 %v1615
    %v1763 = vunpack.c.h.b16 %v1615
    %v1764 = vunpack.c.l.b16 %v1616
    %v1765 = vunpack.c.h.b16 %v1616
    %v1766 = vunpack.c.l.b16 %v1617
    %v1767 = vunpack.c.h.b16 %v1617
    %v1768 = vunpack.c.l.b16 %v1618
    %v1769 = vunpack.c.h.b16 %v1618
    %v1770 = vunpack.c.l.b16 %v1619
    %v1771 = vunpack.c.h.b16 %v1619
    %v1772 = vunpack.c.l.b16 %v1620
    %v1773 = vunpack.c.h.b16 %v1620
    %v1774 = vunpack.c.l.b16 %v1621
    %v1775 = vunpack.c.h.b16 %v1621
    %v1776 = vunpack.c.l.b16 %v1622
    %v1777 = vunpack.c.h.b16 %v1622
    %v1778 = vunpack.c.l.b16 %v1623
    %v1779 = vunpack.c.h.b16 %v1623
    %v1780 = vunpack.c.l.b16 %v1624
    %v1781 = vunpack.c.h.b16 %v1624
    %v1782 = vunpack.c.l.b16 %v1625
    %v1783 = vunpack.c.h.b16 %v1625
    %v1784 = vunpack.c.l.b16 %v1626
    %v1785 = vunpack.c.h.b16 %v1626
    %v1786 = vunpack.c.l.b16 %v1627
    %v1787 = vunpack.c.h.b16 %v1627
    %v1788 = vunpack.c.l.b16 %v1628
    %v1789 = vunpack.c.h.b16 %v1628
    %v1790 = vunpack.c.l.b16 %v1629
    %v1791 = vunpack.c.h.b16 %v1629
    %v1792 = vunpack.c.l.b16 %v1630
    %v1793 = vunpack.c.h.b16 %v1630
    %v1794 = vunpack.c.l.b16 %v1631
    %v1795 = vunpack.c.h.b16 %v1631
    %v1796 = vunpack.c.l.b16 %v1632
    %v1797 = vunpack.c.h.b16 %v1632
    %v1798 = vunpack.c.l.b16 %v1633
    %v1799 = vunpack.c.h.b16 %v1633
    %v1800 = vunpack.c.l.b16 %v1634
    %v1801 = vunpack.c.h.b16 %v1634
    %v1802 = vunpack.c.l.b16 %v1635
    %v1803 = vunpack.c.h.b16 %v1635
    %v1804 = vunpack.c.l.b16 %v1636
    %v1805 = vunpack.c.h.b16 %v1636
    %v1806 = vunpack.c.l.b16 %v1637
    %v1807 = vunpack.c.h.b16 %v1637
    %v1808 = vunpack.c.l.b16 %v1638
    %v1809 = vunpack.c.h.b16 %v1638
    %v1810 = vunpack.c.l.b16 %v1639
    %v1811 = vunpack.c.h.b16 %v1639
    %v1812 = vunpack.c.l.b16 %v1640
    %v1813 = vunpack.c.h.b16 %v1640
    %v1814 = vunpack.c.l.b16 %v1641
    %v1815 = vunpack.c.h.b16 %v1641
    %v1816 = vunpack.c.l.b16 %v1642
    %v1817 = vunpack.c.h.b16 %v1642
    %v1818 = vunpack.c.l.b16 %v1643
    %v1819 = vunpack.c.h.b16 %v1643
    %v1820 = vunpack.c.l.b16 %v1644
    %v1821 = vunpack.c.h.b16 %v1644
    %v1822 = vunpack.c.l.b16 %v1645
    %v1823 = vunpack.c.h.b16 %v1645
    %v1824 = vunpack.c.l.b16 %v1646
    %v1825 = vunpack.c.h.b16 %v1646
    %v1826 = vunpack.c.l.b16 %v1647
    %v1827 = vunpack.c.h.b16 %v1647
    %v1828 = vunpack.c.l.b16 %v1648
    %v1829 = vunpack.c.h.b16 %v1648
    %v1830 = vunpack.c.l.b16 %v1649
    %v1831 = vunpack.c.h.b16 %v1649
    %v1832 = vunpack.c.l.b16 %v1650
    %v1833 = vunpack.c.h.b16 %v1650
    %v1834 = vunpack.c.l.b16 %v1651
    %v1835 = vunpack.c.h.b16 %v1651
    %v1836 = vunpack.c.l.b16 %v1652
    %v1837 = vunpack.c.h.b16 %v1652
    %v1838 = vunpack.c.l.b16 %v1653
    %v1839 = vunpack.c.h.b16 %v1653
    %v1840 = vunpack.c.l.b16 %v1654
    %v1841 = vunpack.c.h.b16 %v1654
    %v1842 = vunpack.c.l.b16 %v1655
    %v1843 = vunpack.c.h.b16 %v1655
    %v1844 = vunpack.c.l.b16 %v1656
    %v1845 = vunpack.c.h.b16 %v1656
    %v1846 = vunpack.c.l.b16 %v1657
    %v1847 = vunpack.c.h.b16 %v1657
    %v1848 = vunpack.c.l.b16 %v1658
    %v1849 = vunpack.c.h.b16 %v1658
    %v1850 = vunpack.c.l.b16 %v1659
    %v1851 = vunpack.c.h.b16 %v1659
    %v1852 = vunpack.c.l.b16 %v1660
    %v1853 = vunpack.c.h.b16 %v1660
    %v1854 = vunpack.c.l.b16 %v1661
    %v1855 = vunpack.c.h.b16 %v1661
    %v1856 = vunpack.c.l.b16 %v1662
    %v1857 = vunpack.c.h.b16 %v1662
    %v1858 = vunpack.c.l.b16 %v1663
    %v1859 = vunpack.c.h.b16 %v1663
    %v1860 = vunpack.c.l.b16 %v1664
    %v1861 = vunpack.c.h.b16 %v1664
    %v1862 = vunpack.c.l.b16 %v1665
    %v1863 = vunpack.c.h.b16 %v1665
    %v1864 = vunpack.c.l.b16 %v1666
    %v1865 = vunpack.c.h.b16 %v1666
    %v1866 = vunpack.c.l.b16 %v1667
    %v1867 = vunpack.c.h.b16 %v1667
    %v1868 = vunpack.c.l.b16 %v1668
    %v1869 = vunpack.c.h.b16 %v1668
    %v1870 = vunpack.c.l.b16 %v1669
    %v1871 = vunpack.c.h.b16 %v1669
    %v1872 = vunpack.c.l.b16 %v1670
    %v1873 = vunpack.c.h.b16 %v1670
    %v1874 = vunpack.c.l.b16 %v1671
    %v1875 = vunpack.c.h.b16 %v1671
    %v1876 = vpack.c.b16 %v1750, %v1748
    %v1877 = vpack.c.b16 %v1751, %v1749
    %v1878 = vpack.c.b16 %v1754, %v1752
    %v1879 = vpack.c.b16 %v1755, %v1753
    %v1880 = vpack.c.b16 %v1758, %v1756
    %v1881 = vpack.c.b16 %v1759, %v1757
    %v1882 = vpack.c.b16 %v1762, %v1760
    %v1883 = vpack.c.b16 %v1763, %v1761
    %v1884 = vpack.c.b16 %v1766, %v1764
    %v1885 = vpack.c.b16 %v1767, %v1765
    %v1886 = vpack.c.b16 %v1770, %v1768
    %v1887 = vpack.c.b16 %v1771, %v1769
    %v1888 = vpack.c.b16 %v1774, %v1772
    %v1889 = vpack.c.b16 %v1775, %v1773
    %v1890 = vpack.c.b16 %v1778, %v1776
    %v1891 = vpack.c.b16 %v1779, %v1777
    %v1892 = vpack.c.b16 %v1782, %v1780
    %v1893 = vpack.c.b16 %v1783, %v1781
    %v1894 = vpack.c.b16 %v1786, %v1784
    %v1895 = vpack.c.b16 %v1787, %v1785
    %v1896 = vpack.c.b16 %v1790, %v1788
    %v1897 = vpack.c.b16 %v1791, %v1789
    %v1898 = vpack.c.b16 %v1794, %v1792
    %v1899 = vpack.c.b16 %v1795, %v1793
    %v1900 = vpack.c.b16 %v1798, %v1796
    %v1901 = vpack.c.b16 %v1799, %v1797
    %v1902 = vpack.c.b16 %v1802, %v1800
    %v1903 = vpack.c.b16 %v1803, %v1801
    %v1904 = vpack.c.b16 %v1806, %v1804
    %v1905 = vpack.c.b16 %v1807, %v1805
    %v1906 = vpack.c.b16 %v1810, %v1808
    %v1907 = vpack.c.b16 %v1811, %v1809
    %v1908 = vpack.c.b16 %v1814, %v1812
    %v1909 = vpack.c.b16 %v1815, %v1813
    %v1910 = vpack.c.b16 %v1818, %v1816
    %v1911 = vpack.c.b16 %v1819, %v1817
    %v1912 = vpack.c.b16 %v1822, %v1820
    %v1913 = vpack.c.b16 %v1823, %v1821
    %v1914 = vpack.c.b16 %v1826, %v1824
    %v1915 = vpack.c.b16 %v1827, %v1825
    %v1916 = vpack.c.b16 %v1830, %v1828
    %v1917 = vpack.c.b16 %v1831, %v1829
    %v1918 = vpack.c.b16 %v1834, %v1832
    %v1919 = vpack.c.b16 %v1835, %v1833
    %v1920 = vpack.c.b16 %v1838, %v1836
    %v1921 = vpack.c.b16 %v1839, %v1837
    %v1922 = vpack.c.b16 %v1842, %v1840
    %v1923 = vpack.c.b16 %v1843, %v1841
    %v1924 = vpack.c.b16 %v1846, %v1844
    %v1925 = vpack.c.b16 %v1847, %v1845
    %v1926 = vpack.c.b16 %v1850, %v1848
    %v1927 = vpack.c.b16 %v1851, %v1849
    %v1928 = vpack.c.b16 %v1854, %v1852
    %v1929 = vpack.c.b16 %v1855, %v1853
    %v1930 = vpack.c.b16 %v1858, %v1856
    %v1931 = vpack.c.b16 %v1859, %v1857
    %v1932 = vpack.c.b16 %v1862, %v1860
    %v1933 = vpack.c.b16 %v1863, %v1861
    %v1934 = vpack.c.b16 %v1866, %v1864
    %v1935 = vpack.c.b16 %v1867, %v1865
    %v1936 = vpack.c.b16 %v1870, %v1868
    %v1937 = vpack.c.b16 %v1871, %v1869
    %v1938 = vpack.c.b16 %v1874, %v1872
    %v1939 = vpack.c.b16 %v1875, %v1873
    %2004 = vmatprep.subr.bf16.mxu0 %v1891
    %2005 = vmatpush1.bf16.msra.mxu0 %v1890
    %2006 = vmatprep.subr.bf16.mxu0 %v1889
    %2007 = vmatpush1.bf16.msra.mxu0 %v1888
    %2008 = vmatprep.subr.bf16.mxu0 %v1887
    %2009 = vmatpush1.bf16.msra.mxu0 %v1886
    %2010 = vmatprep.subr.bf16.mxu0 %v1885
    %2011 = vmatpush1.bf16.msra.mxu0 %v1884
    %2012 = vmatprep.subr.bf16.mxu0 %v1883
    %2013 = vmatpush1.bf16.msra.mxu0 %v1882
    %2014 = vmatprep.subr.bf16.mxu0 %v1881
    %2015 = vmatpush1.bf16.msra.mxu0 %v1880
    %2016 = vmatprep.subr.bf16.mxu0 %v1879
    %2017 = vmatpush1.bf16.msra.mxu0 %v1878
    %2018 = vmatprep.subr.bf16.mxu0 %v1877
    %2019 = vmatpush1.bf16.msra.mxu0 %v1876
    %2020 = vmatprep.subr.bf16.mxu0 %v1907
    %2021 = vmatpush2.bf16.msra.mxu0 %v1906
    %2022 = vmatprep.subr.bf16.mxu0 %v1905
    %2023 = vmatpush2.bf16.msra.mxu0 %v1904
    %2024 = vmatprep.subr.bf16.mxu0 %v1903
    %2025 = vmatpush2.bf16.msra.mxu0 %v1902
    %2026 = vmatprep.subr.bf16.mxu0 %v1901
    %2027 = vmatpush2.bf16.msra.mxu0 %v1900
    %2028 = vmatprep.subr.bf16.mxu0 %v1899
    %2029 = vmatpush2.bf16.msra.mxu0 %v1898
    %2030 = vmatprep.subr.bf16.mxu0 %v1897
    %2031 = vmatpush2.bf16.msra.mxu0 %v1896
    %2032 = vmatprep.subr.bf16.mxu0 %v1895
    %2033 = vmatpush2.bf16.msra.mxu0 %v1894
    %2034 = vmatprep.subr.bf16.mxu0 %v1893
    %2035 = vmatpush2.bf16.msra.mxu0 %v1892
    %2036 = vmatprep.mubr.bf16.mxu0 %v1605
    %2037 = vmatmul.mubr.bf16.gmra.mxu0 %v1604
    %v2038 = vpop.f32.mrf.mxu0
    %v2039 = vadd.f32 %v1677, %v2038
    %v2040 = vpop.f32.mrf.mxu0
    %v2041 = vadd.f32 %v1681, %v2040
    %v2042 = vpop.f32.mrf.mxu0
    %v2043 = vpop.f32.mrf.mxu0
    %2044 = vdwg.mxu0
    %2045 = vmatprep.subr.bf16.mxu0 %v1923
    %2046 = vmatpush1.bf16.msra.mxu0 %v1922
    %2047 = vmatprep.subr.bf16.mxu0 %v1921
    %2048 = vmatpush1.bf16.msra.mxu0 %v1920
    %2049 = vmatprep.subr.bf16.mxu0 %v1919
    %2050 = vmatpush1.bf16.msra.mxu0 %v1918
    %2051 = vmatprep.subr.bf16.mxu0 %v1917
    %2052 = vmatpush1.bf16.msra.mxu0 %v1916
    %2053 = vmatprep.subr.bf16.mxu0 %v1915
    %2054 = vmatpush1.bf16.msra.mxu0 %v1914
    %2055 = vmatprep.subr.bf16.mxu0 %v1913
    %2056 = vmatpush1.bf16.msra.mxu0 %v1912
    %2057 = vmatprep.subr.bf16.mxu0 %v1911
    %2058 = vmatpush1.bf16.msra.mxu0 %v1910
    %2059 = vmatprep.subr.bf16.mxu0 %v1909
    %2060 = vmatpush1.bf16.msra.mxu0 %v1908
    %2061 = vmatprep.subr.bf16.mxu0 %v1939
    %2062 = vmatpush2.bf16.msra.mxu0 %v1938
    %2063 = vmatprep.subr.bf16.mxu0 %v1937
    %2064 = vmatpush2.bf16.msra.mxu0 %v1936
    %2065 = vmatprep.subr.bf16.mxu0 %v1935
    %2066 = vmatpush2.bf16.msra.mxu0 %v1934
    %2067 = vmatprep.subr.bf16.mxu0 %v1933
    %2068 = vmatpush2.bf16.msra.mxu0 %v1932
    %2069 = vmatprep.subr.bf16.mxu0 %v1931
    %2070 = vmatpush2.bf16.msra.mxu0 %v1930
    %2071 = vmatprep.subr.bf16.mxu0 %v1929
    %2072 = vmatpush2.bf16.msra.mxu0 %v1928
    %2073 = vmatprep.subr.bf16.mxu0 %v1927
    %2074 = vmatpush2.bf16.msra.mxu0 %v1926
    %2075 = vmatprep.subr.bf16.mxu0 %v1925
    %2076 = vmatpush2.bf16.msra.mxu0 %v1924
    %2077 = vmatprep.mubr.bf16.mxu0 %v1607
    %2078 = vmatmul.mubr.bf16.gmra.mxu0 %v1606
    %v2079 = vpop.f32.mrf.mxu0
    %v2080 = vadd.f32 %v2039, %v2079
    %v2081 = vpop.f32.mrf.mxu0
    %v2082 = vadd.f32 %v2041, %v2081
    %v2083 = vpop.f32.mrf.mxu0
    %v2084 = vpop.f32.mrf.mxu0
    %2085 = vdwg.mxu0
    %v2086 = vmax.f32 %v2080, 0.0
    %v2087 = vmax.f32 %v2082, 0.0
    %v2088 = vpack.c.bf16 %v2086, %v2086
    %v2089 = vpack.c.bf16 %v2087, %v2087
    %v2090 = vld [vmem:[%s5] sm:$0xf]
    %v2091 = vld [vmem:[%s5 + $0x4] sm:$0xf]
    %v2092 = vld [vmem:[%s5 + $0x8] sm:$0xf]
    %v2093 = vld [vmem:[%s5 + $0xc] sm:$0xf]
    %v2094 = vld [vmem:[%s5 + $0x10] sm:$0xf]
    %v2095 = vld [vmem:[%s5 + $0x14] sm:$0xf]
    %v2096 = vld [vmem:[%s5 + $0x18] sm:$0xf]
    %v2097 = vld [vmem:[%s5 + $0x1c] sm:$0xf]
    %v2098 = vld [vmem:[%s5 + $0x20] sm:$0xf]
    %v2099 = vld [vmem:[%s5 + $0x24] sm:$0xf]
    %v2100 = vld [vmem:[%s5 + $0x28] sm:$0xf]
    %v2101 = vld [vmem:[%s5 + $0x2c] sm:$0xf]
    %v2102 = vld [vmem:[%s5 + $0x30] sm:$0xf]
    %v2103 = vld [vmem:[%s5 + $0x34] sm:$0xf]
    %v2104 = vld [vmem:[%s5 + $0x38] sm:$0xf]
    %v2105 = vld [vmem:[%s5 + $0x3c] sm:$0xf]
    %v2106 = vld [vmem:[%s5 + $0x40] sm:$0xf]
    %v2107 = vld [vmem:[%s5 + $0x44] sm:$0xf]
    %v2108 = vld [vmem:[%s5 + $0x48] sm:$0xf]
    %v2109 = vld [vmem:[%s5 + $0x4c] sm:$0xf]
    %v2110 = vld [vmem:[%s5 + $0x50] sm:$0xf]
    %v2111 = vld [vmem:[%s5 + $0x54] sm:$0xf]
    %v2112 = vld [vmem:[%s5 + $0x58] sm:$0xf]
    %v2113 = vld [vmem:[%s5 + $0x5c] sm:$0xf]
    %v2114 = vld [vmem:[%s5 + $0x60] sm:$0xf]
    %v2115 = vld [vmem:[%s5 + $0x64] sm:$0xf]
    %v2116 = vld [vmem:[%s5 + $0x68] sm:$0xf]
    %v2117 = vld [vmem:[%s5 + $0x6c] sm:$0xf]
    %v2118 = vld [vmem:[%s5 + $0x70] sm:$0xf]
    %v2119 = vld [vmem:[%s5 + $0x74] sm:$0xf]
    %v2120 = vld [vmem:[%s5 + $0x78] sm:$0xf]
    %v2121 = vld [vmem:[%s5 + $0x7c] sm:$0xf]
    %v2122 = vld [vmem:[%s6] sm:$0x1]
    %v2124 = vlaneseq
    %v2125 = vshrl.u32 %v2124, 7
    %v2126 = vsub.s32 0, %v2125
    %v2127 = vrot.slane %v2122, %v2126
    %v2161 = vunpack.c.l.b16 %v2090
    %v2162 = vunpack.c.l.b16 %v2091
    %v2163 = vunpack.c.l.b16 %v2092
    %v2164 = vunpack.c.l.b16 %v2093
    %v2165 = vunpack.c.l.b16 %v2094
    %v2166 = vunpack.c.l.b16 %v2095
    %v2167 = vunpack.c.l.b16 %v2096
    %v2168 = vunpack.c.l.b16 %v2097
    %v2169 = vunpack.c.l.b16 %v2098
    %v2170 = vunpack.c.l.b16 %v2099
    %v2171 = vunpack.c.l.b16 %v2100
    %v2172 = vunpack.c.l.b16 %v2101
    %v2173 = vunpack.c.l.b16 %v2102
    %v2174 = vunpack.c.l.b16 %v2103
    %v2175 = vunpack.c.l.b16 %v2104
    %v2176 = vunpack.c.l.b16 %v2105
    %v2177 = vunpack.c.l.b16 %v2106
    %v2178 = vunpack.c.l.b16 %v2107
    %v2179 = vunpack.c.l.b16 %v2108
    %v2180 = vunpack.c.l.b16 %v2109
    %v2181 = vunpack.c.l.b16 %v2110
    %v2182 = vunpack.c.l.b16 %v2111
    %v2183 = vunpack.c.l.b16 %v2112
    %v2184 = vunpack.c.l.b16 %v2113
    %v2185 = vunpack.c.l.b16 %v2114
    %v2186 = vunpack.c.l.b16 %v2115
    %v2187 = vunpack.c.l.b16 %v2116
    %v2188 = vunpack.c.l.b16 %v2117
    %v2189 = vunpack.c.l.b16 %v2118
    %v2190 = vunpack.c.l.b16 %v2119
    %v2191 = vunpack.c.l.b16 %v2120
    %v2192 = vunpack.c.l.b16 %v2121
    %v2193 = vpack.c.b16 %v2162, %v2161
    %v2194 = vpack.c.b16 %v2164, %v2163
    %v2195 = vpack.c.b16 %v2166, %v2165
    %v2196 = vpack.c.b16 %v2168, %v2167
    %v2197 = vpack.c.b16 %v2170, %v2169
    %v2198 = vpack.c.b16 %v2172, %v2171
    %v2199 = vpack.c.b16 %v2174, %v2173
    %v2200 = vpack.c.b16 %v2176, %v2175
    %v2201 = vpack.c.b16 %v2178, %v2177
    %v2202 = vpack.c.b16 %v2180, %v2179
    %v2203 = vpack.c.b16 %v2182, %v2181
    %v2204 = vpack.c.b16 %v2184, %v2183
    %v2205 = vpack.c.b16 %v2186, %v2185
    %v2206 = vpack.c.b16 %v2188, %v2187
    %v2207 = vpack.c.b16 %v2190, %v2189
    %v2208 = vpack.c.b16 %v2192, %v2191
    %2225 = vmatprep.subr.bf16.mxu0 0
    %2226 = vmatpush1.bf16.msra.mxu0 %v2200
    %2227 = vmatprep.subr.bf16.mxu0 0
    %2228 = vmatpush1.bf16.msra.mxu0 %v2199
    %2229 = vmatprep.subr.bf16.mxu0 0
    %2230 = vmatpush1.bf16.msra.mxu0 %v2198
    %2231 = vmatprep.subr.bf16.mxu0 0
    %2232 = vmatpush1.bf16.msra.mxu0 %v2197
    %2233 = vmatprep.subr.bf16.mxu0 0
    %2234 = vmatpush1.bf16.msra.mxu0 %v2196
    %2235 = vmatprep.subr.bf16.mxu0 0
    %2236 = vmatpush1.bf16.msra.mxu0 %v2195
    %2237 = vmatprep.subr.bf16.mxu0 0
    %2238 = vmatpush1.bf16.msra.mxu0 %v2194
    %2239 = vmatprep.subr.bf16.mxu0 0
    %2240 = vmatpush1.bf16.msra.mxu0 %v2193
    %2241 = vmatprep.subr.bf16.mxu0 0
    %2242 = vmatpush2.bf16.msra.mxu0 %v2208
    %2243 = vmatprep.subr.bf16.mxu0 0
    %2244 = vmatpush2.bf16.msra.mxu0 %v2207
    %2245 = vmatprep.subr.bf16.mxu0 0
    %2246 = vmatpush2.bf16.msra.mxu0 %v2206
    %2247 = vmatprep.subr.bf16.mxu0 0
    %2248 = vmatpush2.bf16.msra.mxu0 %v2205
    %2249 = vmatprep.subr.bf16.mxu0 0
    %2250 = vmatpush2.bf16.msra.mxu0 %v2204
    %2251 = vmatprep.subr.bf16.mxu0 0
    %2252 = vmatpush2.bf16.msra.mxu0 %v2203
    %2253 = vmatprep.subr.bf16.mxu0 0
    %2254 = vmatpush2.bf16.msra.mxu0 %v2202
    %2255 = vmatprep.subr.bf16.mxu0 0
    %2256 = vmatpush2.bf16.msra.mxu0 %v2201
    %2257 = vmatprep.mubr.bf16.mxu0 %v2089
    %2258 = vmatmul.mubr.bf16.gmra.mxu0 %v2088
    %v2259 = vpop.f32.mrf.mxu0
    %v2260 = vadd.f32 %v2127, %v2259
    %v2261 = vpop.f32.mrf.mxu0
    %v2262 = vpop.f32.mrf.mxu0
    %v2263 = vpop.f32.mrf.mxu0
    %2264 = vdwg.mxu0
    %vm2265 = vcmask 80896
    %2266 = vst.msk [vmem:[#allocation7] sm:$0xff] %vm2265, %v2260
    // Predicated region
    $region38: #{tpu_custom_call.1} parent=1 // pred_check
      _
    $region39: #{tpu_custom_call.1} parent=1 // pred_check_branch
      %2268 = sbr.rel (0) target = $region41
    $region40: #{tpu_custom_call.1} parent=1 // pred_region
      %s2270 = ssub.s32 128, 128
      %2271 = vsyncadd [#allocation4], %s2270
      %s2273 = sshll.u32 [#allocation7], 4
      %s2274 = int_to_ptr.vmem [resolvable:$true] %s2273
      %2276 = dma.vmem_to_hbm [thread:$0]  %s2274, 128, %s7, [#allocation4]
    $region41: #{tpu_custom_call.1} parent=1 // pred_fallthru
      _
    // Predicated region
    $region42: #{tpu_custom_call.1} parent=1 // pred_check
      _
    $region43: #{tpu_custom_call.1} parent=1 // pred_check_branch
      %2278 = sbr.rel (0) target = $region45
    $region44: #{tpu_custom_call.1} parent=1 // pred_region
      %2279 = dma.done [#allocation4], 128
    $region45: #{tpu_custom_call.1} parent=1 // pred_fallthru
      _
    %2280 = vsyncpa [#allocation3], 1
    %2281 = vsyncpa [#allocation6], 1
    %2282 = vsyncpa [#allocation4], 1

</llo_original>
